<compile_context>
chip_gen: v6e
topology: v6e:2x2x1
jax: 0.10.0
libtpu: 0.0.40
codegen_flags: <defaults>
</compile_context>

<pallas_src>
import functools

import jax
import jax.numpy as jnp
from jax.experimental import pallas as pl
from jax.experimental.pallas import tpu as pltpu


# ----------------------------------------------------------------------------
# Fused forward kernel (single pallas_call, no grid, everything VMEM-resident)
# ----------------------------------------------------------------------------
def _fused_forward_kernel(x_ref,
                          w1_ref, b1_ref, w2_ref, b2_ref,
                          w3_ref, b3_ref, w4_ref, b4_ref,
                          fw1_ref, fb1_ref, fw2_ref, fb2_ref,
                          fw3_ref, fb3_ref,
                          out_ref, *, num_actions):
    cdt = w1_ref.dtype  # bf16 compute dtype for MXU operands

    def dense(a_f32, w_ref, b_ref):
        # bf16 x bf16 matmul on the MXU with f32 accumulation, f32 bias add.
        y = jnp.dot(a_f32.astype(cdt), w_ref[...],
                    preferred_element_type=jnp.float32)
        return y + b_ref[...]

    x = x_ref[...].astype(jnp.float32)

    # conv1..conv4 (3x3, pad=1, on 1x1 spatial == center-tap matmul) + ReLU
    h = jnp.maximum(dense(x, w1_ref, b1_ref), 0.0)        # (B, 64)
    h = jnp.maximum(dense(h, w2_ref, b2_ref), 0.0)        # (B, 128)
    h = jnp.maximum(dense(h, w3_ref, b3_ref), 0.0)        # (B, 256)
    feat = jnp.maximum(dense(h, w4_ref, b4_ref), 0.0)     # (B, 512)

    # policy head: fc1 + relu -> fc2 (lane-padded) -> masked log_softmax
    p = jnp.maximum(dense(feat, fw1_ref, fb1_ref), 0.0)   # (B, 256)
    logits = dense(p, fw2_ref, fb2_ref)                    # (B, NP) padded
    lane = jax.lax.broadcasted_iota(jnp.int32, logits.shape, 1)
    amask = lane < num_actions
    masked = jnp.where(amask, logits, jnp.float32(-1e30))
    m = jnp.max(masked, axis=-1, keepdims=True)
    ex = jnp.where(amask, jnp.exp(logits - m), jnp.float32(0.0))
    lse = m + jnp.log(jnp.sum(ex, axis=-1, keepdims=True))
    logp = logits - lse                                    # valid in lanes < A

    # value head: fc3 weight is padded so the scalar lands at lane==num_actions
    vslab = jnp.tanh(dense(feat, fw3_ref, fb3_ref))        # (B, NP)

    # single lane-dense output slab: [policy | value | zeros]
    out_ref[...] = jnp.where(amask, logp, vslab).astype(out_ref.dtype)


def _fused_call(x2d, pp, num_actions):
    B = x2d.shape[0]
    NP = pp["fw2"].shape[1]  # padded lane width for the heads (multiple of 128)
    args = (x2d,
            pp["w1"], pp["b1"], pp["w2"], pp["b2"],
            pp["w3"], pp["b3"], pp["w4"], pp["b4"],
            pp["fw1"], pp["fb1"], pp["fw2"], pp["fb2"],
            pp["fw3"], pp["fb3"])
    # All blocks equal the full arrays (no grid): exempt from (8,128) divisibility.
    in_specs = [pl.BlockSpec(a.shape, lambda: (0, 0)) for a in args]
    return pl.pallas_call(
        functools.partial(_fused_forward_kernel, num_actions=num_actions),
        out_shape=jax.ShapeDtypeStruct((B, NP), jnp.float32),
        in_specs=in_specs,
        out_specs=pl.BlockSpec((B, NP), lambda: (0, 0)),
        compiler_params=pltpu.CompilerParams(vmem_limit_bytes=32 * 1024 * 1024),
    )(*args)


# ----------------------------------------------------------------------------
# Parameters (deterministic synthetic init, PyTorch-style layouts)
# ----------------------------------------------------------------------------
def init_params(key, input_channels, num_actions):
    ks = jax.random.split(key, 14)

    def conv(kw, kb, co, ci):
        scale = 1.0 / jnp.sqrt(ci * 9.0)
        return (jax.random.normal(kw, (co, ci, 3, 3), jnp.float32) * scale,
                jax.random.normal(kb, (co,), jnp.float32) * scale)

    def fc(kw, kb, fin, fout):
        scale = 1.0 / jnp.sqrt(float(fin))
        # stored as (in, out) so the kernel computes x @ W directly
        return (jax.random.normal(kw, (fin, fout), jnp.float32) * scale,
                jax.random.normal(kb, (fout,), jnp.float32) * scale)

    p = {}
    p["w1"], p["b1"] = conv(ks[0], ks[1], 64, input_channels)
    p["w2"], p["b2"] = conv(ks[2], ks[3], 128, 64)
    p["w3"], p["b3"] = conv(ks[4], ks[5], 256, 128)
    p["w4"], p["b4"] = conv(ks[6], ks[7], 512, 256)
    p["fcw1"], p["fcb1"] = fc(ks[8], ks[9], 512, 256)
    p["fcw2"], p["fcb2"] = fc(ks[10], ks[11], 256, num_actions)
    p["fcw3"], p["fcb3"] = fc(ks[12], ks[13], 512, 1)
    return p


def prepare_params(params, num_actions):
    """One-time prep: center-tap conv weights, bf16 cast, lane-padded heads."""
    NP = ((num_actions + 1 + 127) // 128) * 128  # padded head width (>= A + 1)
    bf16 = jnp.bfloat16

    def center_tap(w):  # (Co, Ci, 3, 3) -> (Ci, Co); exact for 1x1 spatial
        return jnp.transpose(w[:, :, 1, 1], (1, 0)).astype(bf16)

    def bias_row(b):
        return b.reshape(1, -1).astype(jnp.float32)

    A = num_actions
    fcw2 = params["fcw2"].astype(bf16)                         # (256, A)
    fcw2_pad = jnp.zeros((fcw2.shape[0], NP), bf16).at[:, :A].set(fcw2)
    fcb2_pad = jnp.zeros((1, NP), jnp.float32).at[0, :A].set(
        params["fcb2"].astype(jnp.float32))
    fcw3 = params["fcw3"].astype(bf16)                         # (512, 1)
    fcw3_pad = jnp.zeros((fcw3.shape[0], NP), bf16).at[:, A:A + 1].set(fcw3)
    fcb3_pad = jnp.zeros((1, NP), jnp.float32).at[0, A].set(
        params["fcb3"][0].astype(jnp.float32))

    return {
        "w1": center_tap(params["w1"]), "b1": bias_row(params["b1"]),
        "w2": center_tap(params["w2"]), "b2": bias_row(params["b2"]),
        "w3": center_tap(params["w3"]), "b3": bias_row(params["b3"]),
        "w4": center_tap(params["w4"]), "b4": bias_row(params["b4"]),
        "fw1": params["fcw1"].astype(bf16), "fb1": bias_row(params["fcb1"]),
        "fw2": fcw2_pad, "fb2": fcb2_pad,
        "fw3": fcw3_pad, "fb3": fcb3_pad,
    }


# ----------------------------------------------------------------------------
# Forward pass (mirrors Model.forward)
# ----------------------------------------------------------------------------
@functools.partial(jax.jit, static_argnames=("num_actions",))
def model_forward(prepped, x_nchw, num_actions):
    B, C, H, W = x_nchw.shape
    # fc1/fc3 expect 512 flattened features => spatial must be 1x1
    assert H == 1 and W == 1, "architecture requires 1x1 spatial input"
    x2d = x_nchw.reshape(B, C)
    out = _fused_call(x2d, prepped, num_actions)    # (B, NP) lane-dense slab
    policy = out[:, :num_actions]
    value = out[:, num_actions:num_actions + 1]
    return policy, value


if __name__ == "__main__":
    input_channels = 4
    num_actions = 8
    key = jax.random.PRNGKey(0)
    kp, kx = jax.random.split(key)
    params = init_params(kp, input_channels, num_actions)
    prepped = prepare_params(params, num_actions)
    x = jax.random.normal(kx, (2, input_channels, 1, 1), jnp.float32)
    policy, value = model_forward(prepped, x, num_actions)
    jax.block_until_ready((policy, value))
    assert policy.shape == (2, num_actions) and value.shape == (2, 1)
    print("KERNEL_OK")
</pallas_src>

<mosaic_0001>
module attributes {stable_mosaic.version = 11 : i64} {
  func.func @_fused_forward_kernel(%arg0: memref<2x4xf32, #tpu.memory_space<vmem>>, %arg1: memref<4x64xbf16, #tpu.memory_space<vmem>>, %arg2: memref<1x64xf32, #tpu.memory_space<vmem>>, %arg3: memref<64x128xbf16, #tpu.memory_space<vmem>>, %arg4: memref<1x128xf32, #tpu.memory_space<vmem>>, %arg5: memref<128x256xbf16, #tpu.memory_space<vmem>>, %arg6: memref<1x256xf32, #tpu.memory_space<vmem>>, %arg7: memref<256x512xbf16, #tpu.memory_space<vmem>>, %arg8: memref<1x512xf32, #tpu.memory_space<vmem>>, %arg9: memref<512x256xbf16, #tpu.memory_space<vmem>>, %arg10: memref<1x256xf32, #tpu.memory_space<vmem>>, %arg11: memref<256x128xbf16, #tpu.memory_space<vmem>>, %arg12: memref<1x128xf32, #tpu.memory_space<vmem>>, %arg13: memref<512x128xbf16, #tpu.memory_space<vmem>>, %arg14: memref<1x128xf32, #tpu.memory_space<vmem>>, %arg15: memref<2x128xf32, #tpu.memory_space<vmem>>) attributes {dimension_semantics = [], scalar_prefetch = 0 : i64, scratch_operands = 0 : i64, tpu.core_type = #tpu.core_type<tc>} {
    %c0 = arith.constant 0 : index
    %c0_0 = arith.constant 0 : index
    %0 = vector.load %arg0[%c0, %c0_0] : memref<2x4xf32, #tpu.memory_space<vmem>>, vector<2x4xf32>
    %1 = arith.truncf %0 : vector<2x4xf32> to vector<2x4xbf16>
    %c0_1 = arith.constant 0 : index
    %c0_2 = arith.constant 0 : index
    %2 = vector.load %arg1[%c0_1, %c0_2] : memref<4x64xbf16, #tpu.memory_space<vmem>>, vector<4x64xbf16>
    %cst = arith.constant dense<0.000000e+00> : vector<2x64xf32>
    %3 = tpu.matmul %1, %2, %cst {dimension_numbers = #tpu.dot_dimension_numbers<[1], [0], [0], [1], [0, 0, 1, 1], [], []>} : vector<2x4xbf16>, vector<4x64xbf16>, vector<2x64xf32> -> vector<2x64xf32>
    %c0_3 = arith.constant 0 : index
    %c0_4 = arith.constant 0 : index
    %4 = vector.load %arg2[%c0_3, %c0_4] : memref<1x64xf32, #tpu.memory_space<vmem>>, vector<1x64xf32>
    %5 = vector.broadcast %4 : vector<1x64xf32> to vector<2x64xf32>
    %6 = arith.addf %3, %5 : vector<2x64xf32>
    %cst_5 = arith.constant 0.000000e+00 : f32
    %7 = vector.broadcast %cst_5 : f32 to vector<2x64xf32>
    %8 = arith.maximumf %6, %7 : vector<2x64xf32>
    %9 = arith.truncf %8 : vector<2x64xf32> to vector<2x64xbf16>
    %c0_6 = arith.constant 0 : index
    %c0_7 = arith.constant 0 : index
    %10 = vector.load %arg3[%c0_6, %c0_7] : memref<64x128xbf16, #tpu.memory_space<vmem>>, vector<64x128xbf16>
    %cst_8 = arith.constant dense<0.000000e+00> : vector<2x128xf32>
    %11 = tpu.matmul %9, %10, %cst_8 {dimension_numbers = #tpu.dot_dimension_numbers<[1], [0], [0], [1], [0, 0, 1, 1], [], []>} : vector<2x64xbf16>, vector<64x128xbf16>, vector<2x128xf32> -> vector<2x128xf32>
    %c0_9 = arith.constant 0 : index
    %c0_10 = arith.constant 0 : index
    %12 = vector.load %arg4[%c0_9, %c0_10] : memref<1x128xf32, #tpu.memory_space<vmem>>, vector<1x128xf32>
    %13 = vector.broadcast %12 : vector<1x128xf32> to vector<2x128xf32>
    %14 = arith.addf %11, %13 : vector<2x128xf32>
    %cst_11 = arith.constant 0.000000e+00 : f32
    %15 = vector.broadcast %cst_11 : f32 to vector<2x128xf32>
    %16 = arith.maximumf %14, %15 : vector<2x128xf32>
    %17 = arith.truncf %16 : vector<2x128xf32> to vector<2x128xbf16>
    %c0_12 = arith.constant 0 : index
    %c0_13 = arith.constant 0 : index
    %18 = vector.load %arg5[%c0_12, %c0_13] : memref<128x256xbf16, #tpu.memory_space<vmem>>, vector<128x256xbf16>
    %cst_14 = arith.constant dense<0.000000e+00> : vector<2x256xf32>
    %19 = tpu.matmul %17, %18, %cst_14 {dimension_numbers = #tpu.dot_dimension_numbers<[1], [0], [0], [1], [0, 0, 1, 1], [], []>} : vector<2x128xbf16>, vector<128x256xbf16>, vector<2x256xf32> -> vector<2x256xf32>
    %c0_15 = arith.constant 0 : index
    %c0_16 = arith.constant 0 : index
    %20 = vector.load %arg6[%c0_15, %c0_16] : memref<1x256xf32, #tpu.memory_space<vmem>>, vector<1x256xf32>
    %21 = vector.broadcast %20 : vector<1x256xf32> to vector<2x256xf32>
    %22 = arith.addf %19, %21 : vector<2x256xf32>
    %cst_17 = arith.constant 0.000000e+00 : f32
    %23 = vector.broadcast %cst_17 : f32 to vector<2x256xf32>
    %24 = arith.maximumf %22, %23 : vector<2x256xf32>
    %25 = arith.truncf %24 : vector<2x256xf32> to vector<2x256xbf16>
    %c0_18 = arith.constant 0 : index
    %c0_19 = arith.constant 0 : index
    %26 = vector.load %arg7[%c0_18, %c0_19] : memref<256x512xbf16, #tpu.memory_space<vmem>>, vector<256x512xbf16>
    %cst_20 = arith.constant dense<0.000000e+00> : vector<2x512xf32>
    %27 = tpu.matmul %25, %26, %cst_20 {dimension_numbers = #tpu.dot_dimension_numbers<[1], [0], [0], [1], [0, 0, 1, 1], [], []>} : vector<2x256xbf16>, vector<256x512xbf16>, vector<2x512xf32> -> vector<2x512xf32>
    %c0_21 = arith.constant 0 : index
    %c0_22 = arith.constant 0 : index
    %28 = vector.load %arg8[%c0_21, %c0_22] : memref<1x512xf32, #tpu.memory_space<vmem>>, vector<1x512xf32>
    %29 = vector.broadcast %28 : vector<1x512xf32> to vector<2x512xf32>
    %30 = arith.addf %27, %29 : vector<2x512xf32>
    %cst_23 = arith.constant 0.000000e+00 : f32
    %31 = vector.broadcast %cst_23 : f32 to vector<2x512xf32>
    %32 = arith.maximumf %30, %31 : vector<2x512xf32>
    %33 = arith.truncf %32 : vector<2x512xf32> to vector<2x512xbf16>
    %c0_24 = arith.constant 0 : index
    %c0_25 = arith.constant 0 : index
    %34 = vector.load %arg9[%c0_24, %c0_25] : memref<512x256xbf16, #tpu.memory_space<vmem>>, vector<512x256xbf16>
    %cst_26 = arith.constant dense<0.000000e+00> : vector<2x256xf32>
    %35 = tpu.matmul %33, %34, %cst_26 {dimension_numbers = #tpu.dot_dimension_numbers<[1], [0], [0], [1], [0, 0, 1, 1], [], []>} : vector<2x512xbf16>, vector<512x256xbf16>, vector<2x256xf32> -> vector<2x256xf32>
    %c0_27 = arith.constant 0 : index
    %c0_28 = arith.constant 0 : index
    %36 = vector.load %arg10[%c0_27, %c0_28] : memref<1x256xf32, #tpu.memory_space<vmem>>, vector<1x256xf32>
    %37 = vector.broadcast %36 : vector<1x256xf32> to vector<2x256xf32>
    %38 = arith.addf %35, %37 : vector<2x256xf32>
    %cst_29 = arith.constant 0.000000e+00 : f32
    %39 = vector.broadcast %cst_29 : f32 to vector<2x256xf32>
    %40 = arith.maximumf %38, %39 : vector<2x256xf32>
    %41 = arith.truncf %40 : vector<2x256xf32> to vector<2x256xbf16>
    %c0_30 = arith.constant 0 : index
    %c0_31 = arith.constant 0 : index
    %42 = vector.load %arg11[%c0_30, %c0_31] : memref<256x128xbf16, #tpu.memory_space<vmem>>, vector<256x128xbf16>
    %cst_32 = arith.constant dense<0.000000e+00> : vector<2x128xf32>
    %43 = tpu.matmul %41, %42, %cst_32 {dimension_numbers = #tpu.dot_dimension_numbers<[1], [0], [0], [1], [0, 0, 1, 1], [], []>} : vector<2x256xbf16>, vector<256x128xbf16>, vector<2x128xf32> -> vector<2x128xf32>
    %c0_33 = arith.constant 0 : index
    %c0_34 = arith.constant 0 : index
    %44 = vector.load %arg12[%c0_33, %c0_34] : memref<1x128xf32, #tpu.memory_space<vmem>>, vector<1x128xf32>
    %45 = vector.broadcast %44 : vector<1x128xf32> to vector<2x128xf32>
    %46 = arith.addf %43, %45 : vector<2x128xf32>
    %47 = tpu.iota {dimensions = array<i32: 1>} : vector<2x128xi32>
    %c8_i32 = arith.constant 8 : i32
    %48 = vector.broadcast %c8_i32 : i32 to vector<2x128xi32>
    %49 = arith.cmpi slt, %47, %48 : vector<2x128xi32>
    %cst_35 = arith.constant -1.000000e+30 : f32
    %50 = vector.broadcast %cst_35 : f32 to vector<2x128xf32>
    %51 = arith.select %49, %46, %50 : vector<2x128xi1>, vector<2x128xf32>
    %cst_36 = arith.constant dense<0xFF800000> : vector<2xf32>
    %52 = vector.multi_reduction <maximumf>, %51, %cst_36 [1] : vector<2x128xf32> to vector<2xf32>
    %53 = vector.shape_cast %52 : vector<2xf32> to vector<2x1xf32>
    %54 = vector.broadcast %53 : vector<2x1xf32> to vector<2x128xf32>
    %55 = arith.subf %46, %54 : vector<2x128xf32>
    %56 = math.exp %55 : vector<2x128xf32>
    %cst_37 = arith.constant 0.000000e+00 : f32
    %57 = vector.broadcast %cst_37 : f32 to vector<2x128xf32>
    %58 = arith.select %49, %56, %57 : vector<2x128xi1>, vector<2x128xf32>
    %cst_38 = arith.constant dense<0.000000e+00> : vector<2xf32>
    %59 = vector.multi_reduction <add>, %58, %cst_38 [1] : vector<2x128xf32> to vector<2xf32>
    %60 = vector.shape_cast %59 : vector<2xf32> to vector<2x1xf32>
    %61 = math.log %60 : vector<2x1xf32>
    %62 = arith.addf %53, %61 : vector<2x1xf32>
    %63 = vector.broadcast %62 : vector<2x1xf32> to vector<2x128xf32>
    %64 = arith.subf %46, %63 : vector<2x128xf32>
    %65 = arith.truncf %32 : vector<2x512xf32> to vector<2x512xbf16>
    %c0_39 = arith.constant 0 : index
    %c0_40 = arith.constant 0 : index
    %66 = vector.load %arg13[%c0_39, %c0_40] : memref<512x128xbf16, #tpu.memory_space<vmem>>, vector<512x128xbf16>
    %cst_41 = arith.constant dense<0.000000e+00> : vector<2x128xf32>
    %67 = tpu.matmul %65, %66, %cst_41 {dimension_numbers = #tpu.dot_dimension_numbers<[1], [0], [0], [1], [0, 0, 1, 1], [], []>} : vector<2x512xbf16>, vector<512x128xbf16>, vector<2x128xf32> -> vector<2x128xf32>
    %c0_42 = arith.constant 0 : index
    %c0_43 = arith.constant 0 : index
    %68 = vector.load %arg14[%c0_42, %c0_43] : memref<1x128xf32, #tpu.memory_space<vmem>>, vector<1x128xf32>
    %69 = vector.broadcast %68 : vector<1x128xf32> to vector<2x128xf32>
    %70 = arith.addf %67, %69 : vector<2x128xf32>
    %71 = math.tanh %70 : vector<2x128xf32>
    %72 = arith.select %49, %64, %71 : vector<2x128xi1>, vector<2x128xf32>
    %c0_44 = arith.constant 0 : index
    %c0_45 = arith.constant 0 : index
    %73 = vector.load %arg15[%c0_44, %c0_45] : memref<2x128xf32, #tpu.memory_space<vmem>>, vector<2x128xf32>
    tpu.vector_store %arg15[%c0_44, %c0_45], %72 {strides = array<i32>} : memref<2x128xf32, #tpu.memory_space<vmem>>, vector<2x128xf32>,
    return
  }
}

</mosaic_0001>

<llo_original>
// kernel: model_forward.1
$region0: #{model_forward.1}
  #allocation0 [shape = 'u32[]', space=smem, size = 0x4, offset = 0x4, fixed_abs, tag = 'smem constant byte address 0x4 - core index']
  #allocation1 [shape = 'u32[144,128]{1,0:T(1,128)}', space=vmem, size = 0x12000, scoped, tag = 'internal scratch']
  %s0 = inlined_call_operand.vmem [shape: f32[2,4], index: 0, kind: input, shape index: {}]
  %s1 = inlined_call_operand.vmem [shape: bf16[4,64], index: 1, kind: input, shape index: {}]
  %s2 = inlined_call_operand.vmem [shape: f32[1,64], index: 2, kind: input, shape index: {}]
  %s3 = inlined_call_operand.hbm [shape: bf16[64,128], index: 3, kind: input, shape index: {}]
  %s4 = inlined_call_operand.hbm [shape: f32[1,128], index: 4, kind: input, shape index: {}]
  %s5 = inlined_call_operand.hbm [shape: bf16[128,256], index: 5, kind: input, shape index: {}]
  %s6 = inlined_call_operand.hbm [shape: f32[1,256], index: 6, kind: input, shape index: {}]
  %s7 = inlined_call_operand.hbm [shape: bf16[256,512], index: 7, kind: input, shape index: {}]
  %s8 = inlined_call_operand.vmem [shape: f32[1,512], index: 8, kind: input, shape index: {}]
  %s9 = inlined_call_operand.hbm [shape: bf16[512,256], index: 9, kind: input, shape index: {}]
  %s10 = inlined_call_operand.hbm [shape: f32[1,256], index: 10, kind: input, shape index: {}]
  %s11 = inlined_call_operand.hbm [shape: bf16[256,128], index: 11, kind: input, shape index: {}]
  %s12 = inlined_call_operand.vmem [shape: f32[1,128], index: 12, kind: input, shape index: {}]
  %s13 = inlined_call_operand.hbm [shape: bf16[512,128], index: 13, kind: input, shape index: {}]
  %s14 = inlined_call_operand.vmem [shape: f32[1,128], index: 14, kind: input, shape index: {}]
  %s15 = inlined_call_operand.vmem [shape: f32[2,128], index: 15, kind: output, shape index: {}]
  %s16 = sld [smem:[#allocation0]]
  $region106: #{model_forward.1} parent=0
    _
  %s18 = ssub.s32 1, %s16
  %s19 = scalar_select 0, %s18, %s16
  $region1: #{model_forward.1} parent=0
    #allocation2 [shape = 'u8[16384]{0}', space=vmem, size = 0x4000, scoped, tag = 'input window, operand 3, single buffered']
    #allocation3 [shape = 's32[1]{0}', space=sflag, size = 0x4, scoped, tag = 'scoped memory for model_forward.1']
    #allocation4 [shape = 'u8[512]{0}', space=vmem, size = 0x400, scoped, tag = 'input window, operand 4, single buffered']
    #allocation5 [shape = 's32[1]{0}', space=sflag, size = 0x4, scoped, tag = 'scoped memory for model_forward.1']
    #allocation6 [shape = 'u8[65536]{0}', space=vmem, size = 0x10000, scoped, tag = 'input window, operand 5, single buffered']
    #allocation7 [shape = 'u8[1024]{0}', space=vmem, size = 0x400, scoped, tag = 'input window, operand 6, single buffered']
    #allocation8 [shape = 's32[1]{0}', space=sflag, size = 0x4, scoped, tag = 'scoped memory for model_forward.1']
    #allocation9 [shape = 'u8[262144]{0}', space=vmem, size = 0x40000, scoped, tag = 'input window, operand 7, single buffered']
    #allocation10 [shape = 'u8[262144]{0}', space=vmem, size = 0x40000, scoped, tag = 'input window, operand 9, single buffered']
    #allocation11 [shape = 's32[1]{0}', space=sflag, size = 0x4, scoped, tag = 'scoped memory for model_forward.1']
    #allocation12 [shape = 'u8[1024]{0}', space=vmem, size = 0x400, scoped, tag = 'input window, operand 10, single buffered']
    #allocation13 [shape = 'u8[65536]{0}', space=vmem, size = 0x10000, scoped, tag = 'input window, operand 11, single buffered']
    #allocation14 [shape = 's32[1]{0}', space=sflag, size = 0x4, scoped, tag = 'scoped memory for model_forward.1']
    #allocation15 [shape = 'u8[131072]{0}', space=vmem, size = 0x20000, scoped, tag = 'input window, operand 13, single buffered']
    %20 = vsyncpa [#allocation3], 0
    %21 = vsyncpa [#allocation5], 0
    %22 = vsyncpa [#allocation8], 0
    %23 = vsyncpa [#allocation11], 0
    %24 = vsyncpa [#allocation14], 0
    // Predicated region
    $region2: #{model_forward.1} parent=1 // pred_check
      _
    $region3: #{model_forward.1} parent=1 // pred_check_branch
      %26 = sbr.rel (0) target = $region5
    $region4: #{model_forward.1} parent=1 // pred_region
      _
    $region5: #{model_forward.1} parent=1 // pred_fallthru
      _
    // Predicated region
    $region6: #{model_forward.1} parent=1 // pred_check
      _
    $region7: #{model_forward.1} parent=1 // pred_check_branch
      %28 = sbr.rel (0) target = $region9
    $region8: #{model_forward.1} parent=1 // pred_region
      _
    $region9: #{model_forward.1} parent=1 // pred_fallthru
      _
    // Predicated region
    $region10: #{model_forward.1} parent=1 // pred_check
      _
    $region11: #{model_forward.1} parent=1 // pred_check_branch
      %30 = sbr.rel (0) target = $region13
    $region12: #{model_forward.1} parent=1 // pred_region
      _
    $region13: #{model_forward.1} parent=1 // pred_fallthru
      _
    // Predicated region
    $region14: #{model_forward.1} parent=1 // pred_check
      _
    $region15: #{model_forward.1} parent=1 // pred_check_branch
      %32 = sbr.rel (0) target = $region17
    $region16: #{model_forward.1} parent=1 // pred_region
      %s34 = ssub.s32 512, 512
      %35 = vsyncadd [#allocation3], %s34
      %s36 = sshll.u32 [#allocation2], 4
      %s37 = int_to_ptr.vmem [resolvable:$true] %s36
      %42 = dma.hbm_to_vmem [thread:$0]  %s3, 512, %s37, [#allocation3], 64, 64, 4
    $region17: #{model_forward.1} parent=1 // pred_fallthru
      _
    // Predicated region
    $region18: #{model_forward.1} parent=1 // pred_check
      _
    $region19: #{model_forward.1} parent=1 // pred_check_branch
      %44 = sbr.rel (0) target = $region21
    $region20: #{model_forward.1} parent=1 // pred_region
      %s46 = ssub.s32 16, 16
      %47 = vsyncadd [#allocation5], %s46
      %s49 = sshll.u32 [#allocation4], 4
      %s50 = int_to_ptr.vmem [resolvable:$true] %s49
      %52 = dma.hbm_to_vmem [thread:$0]  %s4, 16, %s50, [#allocation5]
    $region21: #{model_forward.1} parent=1 // pred_fallthru
      _
    // Predicated region
    $region22: #{model_forward.1} parent=1 // pred_check
      _
    $region23: #{model_forward.1} parent=1 // pred_check_branch
      %54 = sbr.rel (0) target = $region25
    $region24: #{model_forward.1} parent=1 // pred_region
      %s56 = ssub.s32 2048, 2048
      %57 = vsyncadd [#allocation5], %s56
      %s58 = sshll.u32 [#allocation6], 4
      %s59 = int_to_ptr.vmem [resolvable:$true] %s58
      %64 = dma.hbm_to_vmem [thread:$0]  %s5, 2048, %s59, [#allocation5], 128, 128, 8
    $region25: #{model_forward.1} parent=1 // pred_fallthru
      _
    // Predicated region
    $region26: #{model_forward.1} parent=1 // pred_check
      _
    $region27: #{model_forward.1} parent=1 // pred_check_branch
      %66 = sbr.rel (0) target = $region29
    $region28: #{model_forward.1} parent=1 // pred_region
      %s68 = ssub.s32 32, 32
      %69 = vsyncadd [#allocation8], %s68
      %s71 = sshll.u32 [#allocation7], 4
      %s72 = int_to_ptr.vmem [resolvable:$true] %s71
      %74 = dma.hbm_to_vmem [thread:$0]  %s6, 32, %s72, [#allocation8]
    $region29: #{model_forward.1} parent=1 // pred_fallthru
      _
    // Predicated region
    $region30: #{model_forward.1} parent=1 // pred_check
      _
    $region31: #{model_forward.1} parent=1 // pred_check_branch
      %76 = sbr.rel (0) target = $region33
    $region32: #{model_forward.1} parent=1 // pred_region
      %s78 = ssub.s32 8192, 8192
      %79 = vsyncadd [#allocation8], %s78
      %s80 = sshll.u32 [#allocation9], 4
      %s81 = int_to_ptr.vmem [resolvable:$true] %s80
      %86 = dma.hbm_to_vmem [thread:$0]  %s7, 8192, %s81, [#allocation8], 256, 256, 16
    $region33: #{model_forward.1} parent=1 // pred_fallthru
      _
    // Predicated region
    $region34: #{model_forward.1} parent=1 // pred_check
      _
    $region35: #{model_forward.1} parent=1 // pred_check_branch
      %88 = sbr.rel (0) target = $region37
    $region36: #{model_forward.1} parent=1 // pred_region
      _
    $region37: #{model_forward.1} parent=1 // pred_fallthru
      _
    // Predicated region
    $region38: #{model_forward.1} parent=1 // pred_check
      _
    $region39: #{model_forward.1} parent=1 // pred_check_branch
      %90 = sbr.rel (0) target = $region41
    $region40: #{model_forward.1} parent=1 // pred_region
      %s92 = ssub.s32 8192, 8192
      %93 = vsyncadd [#allocation11], %s92
      %s94 = sshll.u32 [#allocation10], 4
      %s95 = int_to_ptr.vmem [resolvable:$true] %s94
      %100 = dma.hbm_to_vmem [thread:$0]  %s9, 8192, %s95, [#allocation11], 128, 128, 8
    $region41: #{model_forward.1} parent=1 // pred_fallthru
      _
    // Predicated region
    $region42: #{model_forward.1} parent=1 // pred_check
      _
    $region43: #{model_forward.1} parent=1 // pred_check_branch
      %102 = sbr.rel (0) target = $region45
    $region44: #{model_forward.1} parent=1 // pred_region
      %s104 = ssub.s32 32, 32
      %105 = vsyncadd [#allocation11], %s104
      %s107 = sshll.u32 [#allocation12], 4
      %s108 = int_to_ptr.vmem [resolvable:$true] %s107
      %110 = dma.hbm_to_vmem [thread:$0]  %s10, 32, %s108, [#allocation11]
    $region45: #{model_forward.1} parent=1 // pred_fallthru
      _
    // Predicated region
    $region46: #{model_forward.1} parent=1 // pred_check
      _
    $region47: #{model_forward.1} parent=1 // pred_check_branch
      %112 = sbr.rel (0) target = $region49
    $region48: #{model_forward.1} parent=1 // pred_region
      %s114 = ssub.s32 2048, 2048
      %115 = vsyncadd [#allocation14], %s114
      %s116 = sshll.u32 [#allocation13], 4
      %s117 = int_to_ptr.vmem [resolvable:$true] %s116
      %122 = dma.hbm_to_vmem [thread:$0]  %s11, 2048, %s117, [#allocation14], 64, 64, 4
    $region49: #{model_forward.1} parent=1 // pred_fallthru
      _
    // Predicated region
    $region50: #{model_forward.1} parent=1 // pred_check
      _
    $region51: #{model_forward.1} parent=1 // pred_check_branch
      %124 = sbr.rel (0) target = $region53
    $region52: #{model_forward.1} parent=1 // pred_region
      _
    $region53: #{model_forward.1} parent=1 // pred_fallthru
      _
    // Predicated region
    $region54: #{model_forward.1} parent=1 // pred_check
      _
    $region55: #{model_forward.1} parent=1 // pred_check_branch
      %126 = sbr.rel (0) target = $region57
    $region56: #{model_forward.1} parent=1 // pred_region
      %s128 = ssub.s32 4096, 4096
      %129 = vsyncadd [#allocation14], %s128
      %s130 = sshll.u32 [#allocation15], 4
      %s131 = int_to_ptr.vmem [resolvable:$true] %s130
      %136 = dma.hbm_to_vmem [thread:$0]  %s13, 4096, %s131, [#allocation14], 64, 64, 4
    $region57: #{model_forward.1} parent=1 // pred_fallthru
      _
    // Predicated region
    $region58: #{model_forward.1} parent=1 // pred_check
      _
    $region59: #{model_forward.1} parent=1 // pred_check_branch
      %138 = sbr.rel (0) target = $region61
    $region60: #{model_forward.1} parent=1 // pred_region
      _
    $region61: #{model_forward.1} parent=1 // pred_fallthru
      _
    // Predicated region
    $region62: #{model_forward.1} parent=1 // pred_check
      _
    $region63: #{model_forward.1} parent=1 // pred_check_branch
      %140 = sbr.rel (0) target = $region65
    $region64: #{model_forward.1} parent=1 // pred_region
      %141 = dma.done [#allocation3], 512
    $region65: #{model_forward.1} parent=1 // pred_fallthru
      _
    // Predicated region
    $region66: #{model_forward.1} parent=1 // pred_check
      _
    $region67: #{model_forward.1} parent=1 // pred_check_branch
      %143 = sbr.rel (0) target = $region69
    $region68: #{model_forward.1} parent=1 // pred_region
      %144 = dma.done [#allocation5], 16
    $region69: #{model_forward.1} parent=1 // pred_fallthru
      _
    // Predicated region
    $region70: #{model_forward.1} parent=1 // pred_check
      _
    $region71: #{model_forward.1} parent=1 // pred_check_branch
      %146 = sbr.rel (0) target = $region73
    $region72: #{model_forward.1} parent=1 // pred_region
      %147 = dma.done [#allocation5], 2048
    $region73: #{model_forward.1} parent=1 // pred_fallthru
      _
    // Predicated region
    $region74: #{model_forward.1} parent=1 // pred_check
      _
    $region75: #{model_forward.1} parent=1 // pred_check_branch
      %149 = sbr.rel (0) target = $region77
    $region76: #{model_forward.1} parent=1 // pred_region
      %150 = dma.done [#allocation8], 32
    $region77: #{model_forward.1} parent=1 // pred_fallthru
      _
    // Predicated region
    $region78: #{model_forward.1} parent=1 // pred_check
      _
    $region79: #{model_forward.1} parent=1 // pred_check_branch
      %152 = sbr.rel (0) target = $region81
    $region80: #{model_forward.1} parent=1 // pred_region
      %153 = dma.done [#allocation8], 8192
    $region81: #{model_forward.1} parent=1 // pred_fallthru
      _
    // Predicated region
    $region82: #{model_forward.1} parent=1 // pred_check
      _
    $region83: #{model_forward.1} parent=1 // pred_check_branch
      %155 = sbr.rel (0) target = $region85
    $region84: #{model_forward.1} parent=1 // pred_region
      %156 = dma.done [#allocation11], 8192
    $region85: #{model_forward.1} parent=1 // pred_fallthru
      _
    // Predicated region
    $region86: #{model_forward.1} parent=1 // pred_check
      _
    $region87: #{model_forward.1} parent=1 // pred_check_branch
      %158 = sbr.rel (0) target = $region89
    $region88: #{model_forward.1} parent=1 // pred_region
      %159 = dma.done [#allocation11], 32
    $region89: #{model_forward.1} parent=1 // pred_fallthru
      _
    // Predicated region
    $region90: #{model_forward.1} parent=1 // pred_check
      _
    $region91: #{model_forward.1} parent=1 // pred_check_branch
      %161 = sbr.rel (0) target = $region93
    $region92: #{model_forward.1} parent=1 // pred_region
      %162 = dma.done [#allocation14], 2048
    $region93: #{model_forward.1} parent=1 // pred_fallthru
      _
    // Predicated region
    $region94: #{model_forward.1} parent=1 // pred_check
      _
    $region95: #{model_forward.1} parent=1 // pred_check_branch
      %164 = sbr.rel (0) target = $region97
    $region96: #{model_forward.1} parent=1 // pred_region
      %165 = dma.done [#allocation14], 4096
    $region97: #{model_forward.1} parent=1 // pred_fallthru
      _
    %v167 = vld [vmem:[%s0] sm:$0x3]
    %v168 = vpack.c.bf16 %v167, %v167
    %v169 = vld [vmem:[%s1] sm:$0x3]
    %v170 = vld [vmem:[%s2] sm:$0x1]
    %v172 = vlaneseq
    %v173 = vshrl.u32 %v172, 7
    %v174 = vsub.s32 0, %v173
    %v175 = vrot.slane %v170, %v174
    %vm177 = vcmask 31744
    %v179 = vsel %vm177, %v168, 0
    %vm181 = vcmask 1041408
    %v183 = vsel %vm181, %v169, 0
    %185 = vmatprep.subr.bf16.mxu0 0
    %186 = vmatpush1.bf16.msra.mxu0 0
    %187 = vmatprep.subr.bf16.mxu0 0
    %188 = vmatpush1.bf16.msra.mxu0 0
    %189 = vmatprep.subr.bf16.mxu0 0
    %190 = vmatpush1.bf16.msra.mxu0 0
    %191 = vmatprep.subr.bf16.mxu0 0
    %192 = vmatpush1.bf16.msra.mxu0 0
    %193 = vmatprep.subr.bf16.mxu0 0
    %194 = vmatpush1.bf16.msra.mxu0 0
    %195 = vmatprep.subr.bf16.mxu0 0
    %196 = vmatpush1.bf16.msra.mxu0 0
    %197 = vmatprep.subr.bf16.mxu0 0
    %198 = vmatpush1.bf16.msra.mxu0 0
    %199 = vmatprep.subr.bf16.mxu0 0
    %200 = vmatpush1.bf16.msra.mxu0 %v183
    %201 = vmatprep.subr.bf16.mxu0 0
    %202 = vmatpush2.bf16.msra.mxu0 0
    %203 = vmatprep.subr.bf16.mxu0 0
    %204 = vmatpush2.bf16.msra.mxu0 0
    %205 = vmatprep.subr.bf16.mxu0 0
    %206 = vmatpush2.bf16.msra.mxu0 0
    %207 = vmatprep.subr.bf16.mxu0 0
    %208 = vmatpush2.bf16.msra.mxu0 0
    %209 = vmatprep.subr.bf16.mxu0 0
    %210 = vmatpush2.bf16.msra.mxu0 0
    %211 = vmatprep.subr.bf16.mxu0 0
    %212 = vmatpush2.bf16.msra.mxu0 0
    %213 = vmatprep.subr.bf16.mxu0 0
    %214 = vmatpush2.bf16.msra.mxu0 0
    %215 = vmatprep.subr.bf16.mxu0 0
    %216 = vmatpush2.bf16.msra.mxu0 0
    %217 = vmatprep.mubr.bf16.mxu0 0
    %218 = vmatmul.mubr.bf16.gmra.mxu0 %v179
    %v219 = vpop.f32.mrf.mxu0
    %v220 = vadd.f32 %v175, %v219
    %v221 = vpop.f32.mrf.mxu0
    %v222 = vpop.f32.mrf.mxu0
    %v223 = vpop.f32.mrf.mxu0
    %224 = vdwg.mxu0
    %v225 = vmax.f32 %v220, 0.0
    %v226 = vpack.c.bf16 %v225, %v225
    %v227 = vld [vmem:[#allocation2] sm:$0xf]
    %v228 = vld [vmem:[#allocation2 + $0x4] sm:$0xf]
    %v229 = vld [vmem:[#allocation2 + $0x8] sm:$0xf]
    %v230 = vld [vmem:[#allocation2 + $0xc] sm:$0xf]
    %v231 = vld [vmem:[#allocation2 + $0x10] sm:$0xf]
    %v232 = vld [vmem:[#allocation2 + $0x14] sm:$0xf]
    %v233 = vld [vmem:[#allocation2 + $0x18] sm:$0xf]
    %v234 = vld [vmem:[#allocation2 + $0x1c] sm:$0xf]
    %v235 = vld [vmem:[#allocation4] sm:$0x1]
    %v237 = vlaneseq
    %v238 = vshrl.u32 %v237, 7
    %v239 = vsub.s32 0, %v238
    %v240 = vrot.slane %v235, %v239
    %v250 = vunpack.c.l.b16 %v227
    %v251 = vunpack.c.l.b16 %v228
    %v252 = vunpack.c.l.b16 %v229
    %v253 = vunpack.c.l.b16 %v230
    %v254 = vunpack.c.l.b16 %v231
    %v255 = vunpack.c.l.b16 %v232
    %v256 = vunpack.c.l.b16 %v233
    %v257 = vunpack.c.l.b16 %v234
    %v258 = vpack.c.b16 %v251, %v250
    %v259 = vpack.c.b16 %v253, %v252
    %v260 = vpack.c.b16 %v255, %v254
    %v261 = vpack.c.b16 %v257, %v256
    %vm266 = vcmask 523264
    %v268 = vsel %vm266, %v226, 0
    %270 = vmatprep.subr.bf16.mxu0 0
    %271 = vmatpush1.bf16.msra.mxu0 0
    %272 = vmatprep.subr.bf16.mxu0 0
    %273 = vmatpush1.bf16.msra.mxu0 0
    %274 = vmatprep.subr.bf16.mxu0 0
    %275 = vmatpush1.bf16.msra.mxu0 0
    %276 = vmatprep.subr.bf16.mxu0 0
    %277 = vmatpush1.bf16.msra.mxu0 0
    %278 = vmatprep.subr.bf16.mxu0 0
    %279 = vmatpush1.bf16.msra.mxu0 %v261
    %280 = vmatprep.subr.bf16.mxu0 0
    %281 = vmatpush1.bf16.msra.mxu0 %v260
    %282 = vmatprep.subr.bf16.mxu0 0
    %283 = vmatpush1.bf16.msra.mxu0 %v259
    %284 = vmatprep.subr.bf16.mxu0 0
    %285 = vmatpush1.bf16.msra.mxu0 %v258
    %286 = vmatprep.subr.bf16.mxu0 0
    %287 = vmatpush2.bf16.msra.mxu0 0
    %288 = vmatprep.subr.bf16.mxu0 0
    %289 = vmatpush2.bf16.msra.mxu0 0
    %290 = vmatprep.subr.bf16.mxu0 0
    %291 = vmatpush2.bf16.msra.mxu0 0
    %292 = vmatprep.subr.bf16.mxu0 0
    %293 = vmatpush2.bf16.msra.mxu0 0
    %294 = vmatprep.subr.bf16.mxu0 0
    %295 = vmatpush2.bf16.msra.mxu0 0
    %296 = vmatprep.subr.bf16.mxu0 0
    %297 = vmatpush2.bf16.msra.mxu0 0
    %298 = vmatprep.subr.bf16.mxu0 0
    %299 = vmatpush2.bf16.msra.mxu0 0
    %300 = vmatprep.subr.bf16.mxu0 0
    %301 = vmatpush2.bf16.msra.mxu0 0
    %302 = vmatprep.mubr.bf16.mxu0 0
    %303 = vmatmul.mubr.bf16.gmra.mxu0 %v268
    %v304 = vpop.f32.mrf.mxu0
    %v305 = vadd.f32 %v240, %v304
    %v306 = vpop.f32.mrf.mxu0
    %v307 = vpop.f32.mrf.mxu0
    %v308 = vpop.f32.mrf.mxu0
    %309 = vdwg.mxu0
    %v310 = vmax.f32 %v305, 0.0
    %v311 = vpack.c.bf16 %v310, %v310
    %v312 = vld [vmem:[#allocation6] sm:$0xff]
    %v313 = vld [vmem:[#allocation6 + $0x8] sm:$0xff]
    %v314 = vld [vmem:[#allocation6 + $0x10] sm:$0xff]
    %v315 = vld [vmem:[#allocation6 + $0x18] sm:$0xff]
    %v316 = vld [vmem:[#allocation6 + $0x20] sm:$0xff]
    %v317 = vld [vmem:[#allocation6 + $0x28] sm:$0xff]
    %v318 = vld [vmem:[#allocation6 + $0x30] sm:$0xff]
    %v319 = vld [vmem:[#allocation6 + $0x38] sm:$0xff]
    %v320 = vld [vmem:[#allocation6 + $0x40] sm:$0xff]
    %v321 = vld [vmem:[#allocation6 + $0x48] sm:$0xff]
    %v322 = vld [vmem:[#allocation6 + $0x50] sm:$0xff]
    %v323 = vld [vmem:[#allocation6 + $0x58] sm:$0xff]
    %v324 = vld [vmem:[#allocation6 + $0x60] sm:$0xff]
    %v325 = vld [vmem:[#allocation6 + $0x68] sm:$0xff]
    %v326 = vld [vmem:[#allocation6 + $0x70] sm:$0xff]
    %v327 = vld [vmem:[#allocation6 + $0x78] sm:$0xff]
    %v328 = vld [vmem:[#allocation7] sm:$0x3]
    %v330 = vlaneseq
    %v331 = vshrl.u32 %v330, 7
    %v332 = vsub.s32 0, %v331
    %v333 = vrot.slane %v328, %v332
    %v334 = vlaneseq
    %v335 = vshrl.u32 %v334, 7
    %v336 = vsub.s32 1, %v335
    %v337 = vrot.slane %v328, %v336
    %v356 = vunpack.c.l.b16 %v312
    %v357 = vunpack.c.h.b16 %v312
    %v358 = vunpack.c.l.b16 %v313
    %v359 = vunpack.c.h.b16 %v313
    %v360 = vunpack.c.l.b16 %v314
    %v361 = vunpack.c.h.b16 %v314
    %v362 = vunpack.c.l.b16 %v315
    %v363 = vunpack.c.h.b16 %v315
    %v364 = vunpack.c.l.b16 %v316
    %v365 = vunpack.c.h.b16 %v316
    %v366 = vunpack.c.l.b16 %v317
    %v367 = vunpack.c.h.b16 %v317
    %v368 = vunpack.c.l.b16 %v318
    %v369 = vunpack.c.h.b16 %v318
    %v370 = vunpack.c.l.b16 %v319
    %v371 = vunpack.c.h.b16 %v319
    %v372 = vunpack.c.l.b16 %v320
    %v373 = vunpack.c.h.b16 %v320
    %v374 = vunpack.c.l.b16 %v321
    %v375 = vunpack.c.h.b16 %v321
    %v376 = vunpack.c.l.b16 %v322
    %v377 = vunpack.c.h.b16 %v322
    %v378 = vunpack.c.l.b16 %v323
    %v379 = vunpack.c.h.b16 %v323
    %v380 = vunpack.c.l.b16 %v324
    %v381 = vunpack.c.h.b16 %v324
    %v382 = vunpack.c.l.b16 %v325
    %v383 = vunpack.c.h.b16 %v325
    %v384 = vunpack.c.l.b16 %v326
    %v385 = vunpack.c.h.b16 %v326
    %v386 = vunpack.c.l.b16 %v327
    %v387 = vunpack.c.h.b16 %v327
    %v388 = vpack.c.b16 %v358, %v356
    %v389 = vpack.c.b16 %v359, %v357
    %v390 = vpack.c.b16 %v362, %v360
    %v391 = vpack.c.b16 %v363, %v361
    %v392 = vpack.c.b16 %v366, %v364
    %v393 = vpack.c.b16 %v367, %v365
    %v394 = vpack.c.b16 %v370, %v368
    %v395 = vpack.c.b16 %v371, %v369
    %v396 = vpack.c.b16 %v374, %v372
    %v397 = vpack.c.b16 %v375, %v373
    %v398 = vpack.c.b16 %v378, %v376
    %v399 = vpack.c.b16 %v379, %v377
    %v400 = vpack.c.b16 %v382, %v380
    %v401 = vpack.c.b16 %v383, %v381
    %v402 = vpack.c.b16 %v386, %v384
    %v403 = vpack.c.b16 %v387, %v385
    %420 = vmatprep.subr.bf16.mxu0 %v403
    %421 = vmatpush1.bf16.msra.mxu0 %v402
    %422 = vmatprep.subr.bf16.mxu0 %v401
    %423 = vmatpush1.bf16.msra.mxu0 %v400
    %424 = vmatprep.subr.bf16.mxu0 %v399
    %425 = vmatpush1.bf16.msra.mxu0 %v398
    %426 = vmatprep.subr.bf16.mxu0 %v397
    %427 = vmatpush1.bf16.msra.mxu0 %v396
    %428 = vmatprep.subr.bf16.mxu0 %v395
    %429 = vmatpush1.bf16.msra.mxu0 %v394
    %430 = vmatprep.subr.bf16.mxu0 %v393
    %431 = vmatpush1.bf16.msra.mxu0 %v392
    %432 = vmatprep.subr.bf16.mxu0 %v391
    %433 = vmatpush1.bf16.msra.mxu0 %v390
    %434 = vmatprep.subr.bf16.mxu0 %v389
    %435 = vmatpush1.bf16.msra.mxu0 %v388
    %436 = vmatprep.subr.bf16.mxu0 0
    %437 = vmatpush2.bf16.msra.mxu0 0
    %438 = vmatprep.subr.bf16.mxu0 0
    %439 = vmatpush2.bf16.msra.mxu0 0
    %440 = vmatprep.subr.bf16.mxu0 0
    %441 = vmatpush2.bf16.msra.mxu0 0
    %442 = vmatprep.subr.bf16.mxu0 0
    %443 = vmatpush2.bf16.msra.mxu0 0
    %444 = vmatprep.subr.bf16.mxu0 0
    %445 = vmatpush2.bf16.msra.mxu0 0
    %446 = vmatprep.subr.bf16.mxu0 0
    %447 = vmatpush2.bf16.msra.mxu0 0
    %448 = vmatprep.subr.bf16.mxu0 0
    %449 = vmatpush2.bf16.msra.mxu0 0
    %450 = vmatprep.subr.bf16.mxu0 0
    %451 = vmatpush2.bf16.msra.mxu0 0
    %452 = vmatprep.mubr.bf16.mxu0 0
    %453 = vmatmul.mubr.bf16.gmra.mxu0 %v311
    %v454 = vpop.f32.mrf.mxu0
    %v455 = vadd.f32 %v333, %v454
    %v456 = vpop.f32.mrf.mxu0
    %v457 = vadd.f32 %v337, %v456
    %v458 = vpop.f32.mrf.mxu0
    %v459 = vpop.f32.mrf.mxu0
    %460 = vdwg.mxu0
    %v461 = vmax.f32 %v455, 0.0
    %v462 = vmax.f32 %v457, 0.0
    %v463 = vpack.c.bf16 %v461, %v461
    %v464 = vpack.c.bf16 %v462, %v462
    %v465 = vld [vmem:[#allocation9] sm:$0xff]
    %v466 = vld [vmem:[#allocation9 + $0x8] sm:$0xff]
    %v467 = vld [vmem:[#allocation9 + $0x10] sm:$0xff]
    %v468 = vld [vmem:[#allocation9 + $0x18] sm:$0xff]
    %v469 = vld [vmem:[#allocation9 + $0x20] sm:$0xff]
    %v470 = vld [vmem:[#allocation9 + $0x28] sm:$0xff]
    %v471 = vld [vmem:[#allocation9 + $0x30] sm:$0xff]
    %v472 = vld [vmem:[#allocation9 + $0x38] sm:$0xff]
    %v473 = vld [vmem:[#allocation9 + $0x40] sm:$0xff]
    %v474 = vld [vmem:[#allocation9 + $0x48] sm:$0xff]
    %v475 = vld [vmem:[#allocation9 + $0x50] sm:$0xff]
    %v476 = vld [vmem:[#allocation9 + $0x58] sm:$0xff]
    %v477 = vld [vmem:[#allocation9 + $0x60] sm:$0xff]
    %v478 = vld [vmem:[#allocation9 + $0x68] sm:$0xff]
    %v479 = vld [vmem:[#allocation9 + $0x70] sm:$0xff]
    %v480 = vld [vmem:[#allocation9 + $0x78] sm:$0xff]
    %v481 = vld [vmem:[#allocation9 + $0x80] sm:$0xff]
    %v482 = vld [vmem:[#allocation9 + $0x88] sm:$0xff]
    %v483 = vld [vmem:[#allocation9 + $0x90] sm:$0xff]
    %v484 = vld [vmem:[#allocation9 + $0x98] sm:$0xff]
    %v485 = vld [vmem:[#allocation9 + $0xa0] sm:$0xff]
    %v486 = vld [vmem:[#allocation9 + $0xa8] sm:$0xff]
    %v487 = vld [vmem:[#allocation9 + $0xb0] sm:$0xff]
    %v488 = vld [vmem:[#allocation9 + $0xb8] sm:$0xff]
    %v489 = vld [vmem:[#allocation9 + $0xc0] sm:$0xff]
    %v490 = vld [vmem:[#allocation9 + $0xc8] sm:$0xff]
    %v491 = vld [vmem:[#allocation9 + $0xd0] sm:$0xff]
    %v492 = vld [vmem:[#allocation9 + $0xd8] sm:$0xff]
    %v493 = vld [vmem:[#allocation9 + $0xe0] sm:$0xff]
    %v494 = vld [vmem:[#allocation9 + $0xe8] sm:$0xff]
    %v495 = vld [vmem:[#allocation9 + $0xf0] sm:$0xff]
    %v496 = vld [vmem:[#allocation9 + $0xf8] sm:$0xff]
    %v497 = vld [vmem:[#allocation9 + $0x100] sm:$0xff]
    %v498 = vld [vmem:[#allocation9 + $0x108] sm:$0xff]
    %v499 = vld [vmem:[#allocation9 + $0x110] sm:$0xff]
    %v500 = vld [vmem:[#allocation9 + $0x118] sm:$0xff]
    %v501 = vld [vmem:[#allocation9 + $0x120] sm:$0xff]
    %v502 = vld [vmem:[#allocation9 + $0x128] sm:$0xff]
    %v503 = vld [vmem:[#allocation9 + $0x130] sm:$0xff]
    %v504 = vld [vmem:[#allocation9 + $0x138] sm:$0xff]
    %v505 = vld [vmem:[#allocation9 + $0x140] sm:$0xff]
    %v506 = vld [vmem:[#allocation9 + $0x148] sm:$0xff]
    %v507 = vld [vmem:[#allocation9 + $0x150] sm:$0xff]
    %v508 = vld [vmem:[#allocation9 + $0x158] sm:$0xff]
    %v509 = vld [vmem:[#allocation9 + $0x160] sm:$0xff]
    %v510 = vld [vmem:[#allocation9 + $0x168] sm:$0xff]
    %v511 = vld [vmem:[#allocation9 + $0x170] sm:$0xff]
    %v512 = vld [vmem:[#allocation9 + $0x178] sm:$0xff]
    %v513 = vld [vmem:[#allocation9 + $0x180] sm:$0xff]
    %v514 = vld [vmem:[#allocation9 + $0x188] sm:$0xff]
    %v515 = vld [vmem:[#allocation9 + $0x190] sm:$0xff]
    %v516 = vld [vmem:[#allocation9 + $0x198] sm:$0xff]
    %v517 = vld [vmem:[#allocation9 + $0x1a0] sm:$0xff]
    %v518 = vld [vmem:[#allocation9 + $0x1a8] sm:$0xff]
    %v519 = vld [vmem:[#allocation9 + $0x1b0] sm:$0xff]
    %v520 = vld [vmem:[#allocation9 + $0x1b8] sm:$0xff]
    %v521 = vld [vmem:[#allocation9 + $0x1c0] sm:$0xff]
    %v522 = vld [vmem:[#allocation9 + $0x1c8] sm:$0xff]
    %v523 = vld [vmem:[#allocation9 + $0x1d0] sm:$0xff]
    %v524 = vld [vmem:[#allocation9 + $0x1d8] sm:$0xff]
    %v525 = vld [vmem:[#allocation9 + $0x1e0] sm:$0xff]
    %v526 = vld [vmem:[#allocation9 + $0x1e8] sm:$0xff]
    %v527 = vld [vmem:[#allocation9 + $0x1f0] sm:$0xff]
    %v528 = vld [vmem:[#allocation9 + $0x1f8] sm:$0xff]
    %v529 = vld [vmem:[%s8] sm:$0xf]
    %v531 = vlaneseq
    %v532 = vshrl.u32 %v531, 7
    %v533 = vsub.s32 0, %v532
    %v534 = vrot.slane %v529, %v533
    %v535 = vlaneseq
    %v536 = vshrl.u32 %v535, 7
    %v537 = vsub.s32 1, %v536
    %v538 = vrot.slane %v529, %v537
    %v539 = vlaneseq
    %v540 = vshrl.u32 %v539, 7
    %v541 = vsub.s32 2, %v540
    %v542 = vrot.slane %v529, %v541
    %v543 = vlaneseq
    %v544 = vshrl.u32 %v543, 7
    %v545 = vsub.s32 3, %v544
    %v546 = vrot.slane %v529, %v545
    %v615 = vunpack.c.l.b16 %v465
    %v616 = vunpack.c.h.b16 %v465
    %v617 = vunpack.c.l.b16 %v466
    %v618 = vunpack.c.h.b16 %v466
    %v619 = vunpack.c.l.b16 %v467
    %v620 = vunpack.c.h.b16 %v467
    %v621 = vunpack.c.l.b16 %v468
    %v622 = vunpack.c.h.b16 %v468
    %v623 = vunpack.c.l.b16 %v469
    %v624 = vunpack.c.h.b16 %v469
    %v625 = vunpack.c.l.b16 %v470
    %v626 = vunpack.c.h.b16 %v470
    %v627 = vunpack.c.l.b16 %v471
    %v628 = vunpack.c.h.b16 %v471
    %v629 = vunpack.c.l.b16 %v472
    %v630 = vunpack.c.h.b16 %v472
    %v631 = vunpack.c.l.b16 %v473
    %v632 = vunpack.c.h.b16 %v473
    %v633 = vunpack.c.l.b16 %v474
    %v634 = vunpack.c.h.b16 %v474
    %v635 = vunpack.c.l.b16 %v475
    %v636 = vunpack.c.h.b16 %v475
    %v637 = vunpack.c.l.b16 %v476
    %v638 = vunpack.c.h.b16 %v476
    %v639 = vunpack.c.l.b16 %v477
    %v640 = vunpack.c.h.b16 %v477
    %v641 = vunpack.c.l.b16 %v478
    %v642 = vunpack.c.h.b16 %v478
    %v643 = vunpack.c.l.b16 %v479
    %v644 = vunpack.c.h.b16 %v479
    %v645 = vunpack.c.l.b16 %v480
    %v646 = vunpack.c.h.b16 %v480
    %v647 = vunpack.c.l.b16 %v481
    %v648 = vunpack.c.h.b16 %v481
    %v649 = vunpack.c.l.b16 %v482
    %v650 = vunpack.c.h.b16 %v482
    %v651 = vunpack.c.l.b16 %v483
    %v652 = vunpack.c.h.b16 %v483
    %v653 = vunpack.c.l.b16 %v484
    %v654 = vunpack.c.h.b16 %v484
    %v655 = vunpack.c.l.b16 %v485
    %v656 = vunpack.c.h.b16 %v485
    %v657 = vunpack.c.l.b16 %v486
    %v658 = vunpack.c.h.b16 %v486
    %v659 = vunpack.c.l.b16 %v487
    %v660 = vunpack.c.h.b16 %v487
    %v661 = vunpack.c.l.b16 %v488
    %v662 = vunpack.c.h.b16 %v488
    %v663 = vunpack.c.l.b16 %v489
    %v664 = vunpack.c.h.b16 %v489
    %v665 = vunpack.c.l.b16 %v490
    %v666 = vunpack.c.h.b16 %v490
    %v667 = vunpack.c.l.b16 %v491
    %v668 = vunpack.c.h.b16 %v491
    %v669 = vunpack.c.l.b16 %v492
    %v670 = vunpack.c.h.b16 %v492
    %v671 = vunpack.c.l.b16 %v493
    %v672 = vunpack.c.h.b16 %v493
    %v673 = vunpack.c.l.b16 %v494
    %v674 = vunpack.c.h.b16 %v494
    %v675 = vunpack.c.l.b16 %v495
    %v676 = vunpack.c.h.b16 %v495
    %v677 = vunpack.c.l.b16 %v496
    %v678 = vunpack.c.h.b16 %v496
    %v679 = vunpack.c.l.b16 %v497
    %v680 = vunpack.c.h.b16 %v497
    %v681 = vunpack.c.l.b16 %v498
    %v682 = vunpack.c.h.b16 %v498
    %v683 = vunpack.c.l.b16 %v499
    %v684 = vunpack.c.h.b16 %v499
    %v685 = vunpack.c.l.b16 %v500
    %v686 = vunpack.c.h.b16 %v500
    %v687 = vunpack.c.l.b16 %v501
    %v688 = vunpack.c.h.b16 %v501
    %v689 = vunpack.c.l.b16 %v502
    %v690 = vunpack.c.h.b16 %v502
    %v691 = vunpack.c.l.b16 %v503
    %v692 = vunpack.c.h.b16 %v503
    %v693 = vunpack.c.l.b16 %v504
    %v694 = vunpack.c.h.b16 %v504
    %v695 = vunpack.c.l.b16 %v505
    %v696 = vunpack.c.h.b16 %v505
    %v697 = vunpack.c.l.b16 %v506
    %v698 = vunpack.c.h.b16 %v506
    %v699 = vunpack.c.l.b16 %v507
    %v700 = vunpack.c.h.b16 %v507
    %v701 = vunpack.c.l.b16 %v508
    %v702 = vunpack.c.h.b16 %v508
    %v703 = vunpack.c.l.b16 %v509
    %v704 = vunpack.c.h.b16 %v509
    %v705 = vunpack.c.l.b16 %v510
    %v706 = vunpack.c.h.b16 %v510
    %v707 = vunpack.c.l.b16 %v511
    %v708 = vunpack.c.h.b16 %v511
    %v709 = vunpack.c.l.b16 %v512
    %v710 = vunpack.c.h.b16 %v512
    %v711 = vunpack.c.l.b16 %v513
    %v712 = vunpack.c.h.b16 %v513
    %v713 = vunpack.c.l.b16 %v514
    %v714 = vunpack.c.h.b16 %v514
    %v715 = vunpack.c.l.b16 %v515
    %v716 = vunpack.c.h.b16 %v515
    %v717 = vunpack.c.l.b16 %v516
    %v718 = vunpack.c.h.b16 %v516
    %v719 = vunpack.c.l.b16 %v517
    %v720 = vunpack.c.h.b16 %v517
    %v721 = vunpack.c.l.b16 %v518
    %v722 = vunpack.c.h.b16 %v518
    %v723 = vunpack.c.l.b16 %v519
    %v724 = vunpack.c.h.b16 %v519
    %v725 = vunpack.c.l.b16 %v520
    %v726 = vunpack.c.h.b16 %v520
    %v727 = vunpack.c.l.b16 %v521
    %v728 = vunpack.c.h.b16 %v521
    %v729 = vunpack.c.l.b16 %v522
    %v730 = vunpack.c.h.b16 %v522
    %v731 = vunpack.c.l.b16 %v523
    %v732 = vunpack.c.h.b16 %v523
    %v733 = vunpack.c.l.b16 %v524
    %v734 = vunpack.c.h.b16 %v524
    %v735 = vunpack.c.l.b16 %v525
    %v736 = vunpack.c.h.b16 %v525
    %v737 = vunpack.c.l.b16 %v526
    %v738 = vunpack.c.h.b16 %v526
    %v739 = vunpack.c.l.b16 %v527
    %v740 = vunpack.c.h.b16 %v527
    %v741 = vunpack.c.l.b16 %v528
    %v742 = vunpack.c.h.b16 %v528
    %v743 = vpack.c.b16 %v619, %v615
    %v744 = vpack.c.b16 %v620, %v616
    %v745 = vpack.c.b16 %v621, %v617
    %v746 = vpack.c.b16 %v622, %v618
    %v747 = vpack.c.b16 %v627, %v623
    %v748 = vpack.c.b16 %v628, %v624
    %v749 = vpack.c.b16 %v629, %v625
    %v750 = vpack.c.b16 %v630, %v626
    %v751 = vpack.c.b16 %v635, %v631
    %v752 = vpack.c.b16 %v636, %v632
    %v753 = vpack.c.b16 %v637, %v633
    %v754 = vpack.c.b16 %v638, %v634
    %v755 = vpack.c.b16 %v643, %v639
    %v756 = vpack.c.b16 %v644, %v640
    %v757 = vpack.c.b16 %v645, %v641
    %v758 = vpack.c.b16 %v646, %v642
    %v759 = vpack.c.b16 %v651, %v647
    %v760 = vpack.c.b16 %v652, %v648
    %v761 = vpack.c.b16 %v653, %v649
    %v762 = vpack.c.b16 %v654, %v650
    %v763 = vpack.c.b16 %v659, %v655
    %v764 = vpack.c.b16 %v660, %v656
    %v765 = vpack.c.b16 %v661, %v657
    %v766 = vpack.c.b16 %v662, %v658
    %v767 = vpack.c.b16 %v667, %v663
    %v768 = vpack.c.b16 %v668, %v664
    %v769 = vpack.c.b16 %v669, %v665
    %v770 = vpack.c.b16 %v670, %v666
    %v771 = vpack.c.b16 %v675, %v671
    %v772 = vpack.c.b16 %v676, %v672
    %v773 = vpack.c.b16 %v677, %v673
    %v774 = vpack.c.b16 %v678, %v674
    %v775 = vpack.c.b16 %v683, %v679
    %v776 = vpack.c.b16 %v684, %v680
    %v777 = vpack.c.b16 %v685, %v681
    %v778 = vpack.c.b16 %v686, %v682
    %v779 = vpack.c.b16 %v691, %v687
    %v780 = vpack.c.b16 %v692, %v688
    %v781 = vpack.c.b16 %v693, %v689
    %v782 = vpack.c.b16 %v694, %v690
    %v783 = vpack.c.b16 %v699, %v695
    %v784 = vpack.c.b16 %v700, %v696
    %v785 = vpack.c.b16 %v701, %v697
    %v786 = vpack.c.b16 %v702, %v698
    %v787 = vpack.c.b16 %v707, %v703
    %v788 = vpack.c.b16 %v708, %v704
    %v789 = vpack.c.b16 %v709, %v705
    %v790 = vpack.c.b16 %v710, %v706
    %v791 = vpack.c.b16 %v715, %v711
    %v792 = vpack.c.b16 %v716, %v712
    %v793 = vpack.c.b16 %v717, %v713
    %v794 = vpack.c.b16 %v718, %v714
    %v795 = vpack.c.b16 %v723, %v719
    %v796 = vpack.c.b16 %v724, %v720
    %v797 = vpack.c.b16 %v725, %v721
    %v798 = vpack.c.b16 %v726, %v722
    %v799 = vpack.c.b16 %v731, %v727
    %v800 = vpack.c.b16 %v732, %v728
    %v801 = vpack.c.b16 %v733, %v729
    %v802 = vpack.c.b16 %v734, %v730
    %v803 = vpack.c.b16 %v739, %v735
    %v804 = vpack.c.b16 %v740, %v736
    %v805 = vpack.c.b16 %v741, %v737
    %v806 = vpack.c.b16 %v742, %v738
    %871 = vmatprep.subr.bf16.mxu0 %v772
    %872 = vmatpush1.bf16.msra.mxu0 %v771
    %873 = vmatprep.subr.bf16.mxu0 %v768
    %874 = vmatpush1.bf16.msra.mxu0 %v767
    %875 = vmatprep.subr.bf16.mxu0 %v764
    %876 = vmatpush1.bf16.msra.mxu0 %v763
    %877 = vmatprep.subr.bf16.mxu0 %v760
    %878 = vmatpush1.bf16.msra.mxu0 %v759
    %879 = vmatprep.subr.bf16.mxu0 %v756
    %880 = vmatpush1.bf16.msra.mxu0 %v755
    %881 = vmatprep.subr.bf16.mxu0 %v752
    %882 = vmatpush1.bf16.msra.mxu0 %v751
    %883 = vmatprep.subr.bf16.mxu0 %v748
    %884 = vmatpush1.bf16.msra.mxu0 %v747
    %885 = vmatprep.subr.bf16.mxu0 %v744
    %886 = vmatpush1.bf16.msra.mxu0 %v743
    %887 = vmatprep.subr.bf16.mxu0 %v804
    %888 = vmatpush2.bf16.msra.mxu0 %v803
    %889 = vmatprep.subr.bf16.mxu0 %v800
    %890 = vmatpush2.bf16.msra.mxu0 %v799
    %891 = vmatprep.subr.bf16.mxu0 %v796
    %892 = vmatpush2.bf16.msra.mxu0 %v795
    %893 = vmatprep.subr.bf16.mxu0 %v792
    %894 = vmatpush2.bf16.msra.mxu0 %v791
    %895 = vmatprep.subr.bf16.mxu0 %v788
    %896 = vmatpush2.bf16.msra.mxu0 %v787
    %897 = vmatprep.subr.bf16.mxu0 %v784
    %898 = vmatpush2.bf16.msra.mxu0 %v783
    %899 = vmatprep.subr.bf16.mxu0 %v780
    %900 = vmatpush2.bf16.msra.mxu0 %v779
    %901 = vmatprep.subr.bf16.mxu0 %v776
    %902 = vmatpush2.bf16.msra.mxu0 %v775
    %903 = vmatprep.mubr.bf16.mxu0 %v464
    %904 = vmatmul.mubr.bf16.gmra.mxu0 %v463
    %v905 = vpop.f32.mrf.mxu0
    %v906 = vadd.f32 %v534, %v905
    %v907 = vpop.f32.mrf.mxu0
    %v908 = vadd.f32 %v538, %v907
    %v909 = vpop.f32.mrf.mxu0
    %v910 = vpop.f32.mrf.mxu0
    %911 = vdwg.mxu0
    %912 = vmatprep.subr.bf16.mxu0 %v774
    %913 = vmatpush1.bf16.msra.mxu0 %v773
    %914 = vmatprep.subr.bf16.mxu0 %v770
    %915 = vmatpush1.bf16.msra.mxu0 %v769
    %916 = vmatprep.subr.bf16.mxu0 %v766
    %917 = vmatpush1.bf16.msra.mxu0 %v765
    %918 = vmatprep.subr.bf16.mxu0 %v762
    %919 = vmatpush1.bf16.msra.mxu0 %v761
    %920 = vmatprep.subr.bf16.mxu0 %v758
    %921 = vmatpush1.bf16.msra.mxu0 %v757
    %922 = vmatprep.subr.bf16.mxu0 %v754
    %923 = vmatpush1.bf16.msra.mxu0 %v753
    %924 = vmatprep.subr.bf16.mxu0 %v750
    %925 = vmatpush1.bf16.msra.mxu0 %v749
    %926 = vmatprep.subr.bf16.mxu0 %v746
    %927 = vmatpush1.bf16.msra.mxu0 %v745
    %928 = vmatprep.subr.bf16.mxu0 %v806
    %929 = vmatpush2.bf16.msra.mxu0 %v805
    %930 = vmatprep.subr.bf16.mxu0 %v802
    %931 = vmatpush2.bf16.msra.mxu0 %v801
    %932 = vmatprep.subr.bf16.mxu0 %v798
    %933 = vmatpush2.bf16.msra.mxu0 %v797
    %934 = vmatprep.subr.bf16.mxu0 %v794
    %935 = vmatpush2.bf16.msra.mxu0 %v793
    %936 = vmatprep.subr.bf16.mxu0 %v790
    %937 = vmatpush2.bf16.msra.mxu0 %v789
    %938 = vmatprep.subr.bf16.mxu0 %v786
    %939 = vmatpush2.bf16.msra.mxu0 %v785
    %940 = vmatprep.subr.bf16.mxu0 %v782
    %941 = vmatpush2.bf16.msra.mxu0 %v781
    %942 = vmatprep.subr.bf16.mxu0 %v778
    %943 = vmatpush2.bf16.msra.mxu0 %v777
    %944 = vmatprep.mubr.bf16.mxu0 %v464
    %945 = vmatmul.mubr.bf16.gmra.mxu0 %v463
    %v946 = vpop.f32.mrf.mxu0
    %v947 = vadd.f32 %v542, %v946
    %v948 = vpop.f32.mrf.mxu0
    %v949 = vadd.f32 %v546, %v948
    %v950 = vpop.f32.mrf.mxu0
    %v951 = vpop.f32.mrf.mxu0
    %952 = vdwg.mxu0
    %v953 = vmax.f32 %v906, 0.0
    %v954 = vmax.f32 %v908, 0.0
    %v955 = vmax.f32 %v947, 0.0
    %v956 = vmax.f32 %v949, 0.0
    %v957 = vpack.c.bf16 %v953, %v953
    %v958 = vpack.c.bf16 %v954, %v954
    %v959 = vpack.c.bf16 %v955, %v955
    %v960 = vpack.c.bf16 %v956, %v956
    %v961 = vld [vmem:[#allocation10] sm:$0xff]
    %v962 = vld [vmem:[#allocation10 + $0x8] sm:$0xff]
    %v963 = vld [vmem:[#allocation10 + $0x10] sm:$0xff]
    %v964 = vld [vmem:[#allocation10 + $0x18] sm:$0xff]
    %v965 = vld [vmem:[#allocation10 + $0x20] sm:$0xff]
    %v966 = vld [vmem:[#allocation10 + $0x28] sm:$0xff]
    %v967 = vld [vmem:[#allocation10 + $0x30] sm:$0xff]
    %v968 = vld [vmem:[#allocation10 + $0x38] sm:$0xff]
    %v969 = vld [vmem:[#allocation10 + $0x40] sm:$0xff]
    %v970 = vld [vmem:[#allocation10 + $0x48] sm:$0xff]
    %v971 = vld [vmem:[#allocation10 + $0x50] sm:$0xff]
    %v972 = vld [vmem:[#allocation10 + $0x58] sm:$0xff]
    %v973 = vld [vmem:[#allocation10 + $0x60] sm:$0xff]
    %v974 = vld [vmem:[#allocation10 + $0x68] sm:$0xff]
    %v975 = vld [vmem:[#allocation10 + $0x70] sm:$0xff]
    %v976 = vld [vmem:[#allocation10 + $0x78] sm:$0xff]
    %v977 = vld [vmem:[#allocation10 + $0x80] sm:$0xff]
    %v978 = vld [vmem:[#allocation10 + $0x88] sm:$0xff]
    %v979 = vld [vmem:[#allocation10 + $0x90] sm:$0xff]
    %v980 = vld [vmem:[#allocation10 + $0x98] sm:$0xff]
    %v981 = vld [vmem:[#allocation10 + $0xa0] sm:$0xff]
    %v982 = vld [vmem:[#allocation10 + $0xa8] sm:$0xff]
    %v983 = vld [vmem:[#allocation10 + $0xb0] sm:$0xff]
    %v984 = vld [vmem:[#allocation10 + $0xb8] sm:$0xff]
    %v985 = vld [vmem:[#allocation10 + $0xc0] sm:$0xff]
    %v986 = vld [vmem:[#allocation10 + $0xc8] sm:$0xff]
    %v987 = vld [vmem:[#allocation10 + $0xd0] sm:$0xff]
    %v988 = vld [vmem:[#allocation10 + $0xd8] sm:$0xff]
    %v989 = vld [vmem:[#allocation10 + $0xe0] sm:$0xff]
    %v990 = vld [vmem:[#allocation10 + $0xe8] sm:$0xff]
    %v991 = vld [vmem:[#allocation10 + $0xf0] sm:$0xff]
    %v992 = vld [vmem:[#allocation10 + $0xf8] sm:$0xff]
    %v993 = vld [vmem:[#allocation10 + $0x100] sm:$0xff]
    %v994 = vld [vmem:[#allocation10 + $0x108] sm:$0xff]
    %v995 = vld [vmem:[#allocation10 + $0x110] sm:$0xff]
    %v996 = vld [vmem:[#allocation10 + $0x118] sm:$0xff]
    %v997 = vld [vmem:[#allocation10 + $0x120] sm:$0xff]
    %v998 = vld [vmem:[#allocation10 + $0x128] sm:$0xff]
    %v999 = vld [vmem:[#allocation10 + $0x130] sm:$0xff]
    %v1000 = vld [vmem:[#allocation10 + $0x138] sm:$0xff]
    %v1001 = vld [vmem:[#allocation10 + $0x140] sm:$0xff]
    %v1002 = vld [vmem:[#allocation10 + $0x148] sm:$0xff]
    %v1003 = vld [vmem:[#allocation10 + $0x150] sm:$0xff]
    %v1004 = vld [vmem:[#allocation10 + $0x158] sm:$0xff]
    %v1005 = vld [vmem:[#allocation10 + $0x160] sm:$0xff]
    %v1006 = vld [vmem:[#allocation10 + $0x168] sm:$0xff]
    %v1007 = vld [vmem:[#allocation10 + $0x170] sm:$0xff]
    %v1008 = vld [vmem:[#allocation10 + $0x178] sm:$0xff]
    %v1009 = vld [vmem:[#allocation10 + $0x180] sm:$0xff]
    %v1010 = vld [vmem:[#allocation10 + $0x188] sm:$0xff]
    %v1011 = vld [vmem:[#allocation10 + $0x190] sm:$0xff]
    %v1012 = vld [vmem:[#allocation10 + $0x198] sm:$0xff]
    %v1013 = vld [vmem:[#allocation10 + $0x1a0] sm:$0xff]
    %v1014 = vld [vmem:[#allocation10 + $0x1a8] sm:$0xff]
    %v1015 = vld [vmem:[#allocation10 + $0x1b0] sm:$0xff]
    %v1016 = vld [vmem:[#allocation10 + $0x1b8] sm:$0xff]
    %v1017 = vld [vmem:[#allocation10 + $0x1c0] sm:$0xff]
    %v1018 = vld [vmem:[#allocation10 + $0x1c8] sm:$0xff]
    %v1019 = vld [vmem:[#allocation10 + $0x1d0] sm:$0xff]
    %v1020 = vld [vmem:[#allocation10 + $0x1d8] sm:$0xff]
    %v1021 = vld [vmem:[#allocation10 + $0x1e0] sm:$0xff]
    %v1022 = vld [vmem:[#allocation10 + $0x1e8] sm:$0xff]
    %v1023 = vld [vmem:[#allocation10 + $0x1f0] sm:$0xff]
    %v1024 = vld [vmem:[#allocation10 + $0x1f8] sm:$0xff]
    %v1025 = vld [vmem:[#allocation12] sm:$0x3]
    %v1027 = vlaneseq
    %v1028 = vshrl.u32 %v1027, 7
    %v1029 = vsub.s32 0, %v1028
    %v1030 = vrot.slane %v1025, %v1029
    %v1031 = vlaneseq
    %v1032 = vshrl.u32 %v1031, 7
    %v1033 = vsub.s32 1, %v1032
    %v1034 = vrot.slane %v1025, %v1033
    %v1101 = vunpack.c.l.b16 %v961
    %v1102 = vunpack.c.h.b16 %v961
    %v1103 = vunpack.c.l.b16 %v962
    %v1104 = vunpack.c.h.b16 %v962
    %v1105 = vunpack.c.l.b16 %v963
    %v1106 = vunpack.c.h.b16 %v963
    %v1107 = vunpack.c.l.b16 %v964
    %v1108 = vunpack.c.h.b16 %v964
    %v1109 = vunpack.c.l.b16 %v965
    %v1110 = vunpack.c.h.b16 %v965
    %v1111 = vunpack.c.l.b16 %v966
    %v1112 = vunpack.c.h.b16 %v966
    %v1113 = vunpack.c.l.b16 %v967
    %v1114 = vunpack.c.h.b16 %v967
    %v1115 = vunpack.c.l.b16 %v968
    %v1116 = vunpack.c.h.b16 %v968
    %v1117 = vunpack.c.l.b16 %v969
    %v1118 = vunpack.c.h.b16 %v969
    %v1119 = vunpack.c.l.b16 %v970
    %v1120 = vunpack.c.h.b16 %v970
    %v1121 = vunpack.c.l.b16 %v971
    %v1122 = vunpack.c.h.b16 %v971
    %v1123 = vunpack.c.l.b16 %v972
    %v1124 = vunpack.c.h.b16 %v972
    %v1125 = vunpack.c.l.b16 %v973
    %v1126 = vunpack.c.h.b16 %v973
    %v1127 = vunpack.c.l.b16 %v974
    %v1128 = vunpack.c.h.b16 %v974
    %v1129 = vunpack.c.l.b16 %v975
    %v1130 = vunpack.c.h.b16 %v975
    %v1131 = vunpack.c.l.b16 %v976
    %v1132 = vunpack.c.h.b16 %v976
    %v1133 = vunpack.c.l.b16 %v977
    %v1134 = vunpack.c.h.b16 %v977
    %v1135 = vunpack.c.l.b16 %v978
    %v1136 = vunpack.c.h.b16 %v978
    %v1137 = vunpack.c.l.b16 %v979
    %v1138 = vunpack.c.h.b16 %v979
    %v1139 = vunpack.c.l.b16 %v980
    %v1140 = vunpack.c.h.b16 %v980
    %v1141 = vunpack.c.l.b16 %v981
    %v1142 = vunpack.c.h.b16 %v981
    %v1143 = vunpack.c.l.b16 %v982
    %v1144 = vunpack.c.h.b16 %v982
    %v1145 = vunpack.c.l.b16 %v983
    %v1146 = vunpack.c.h.b16 %v983
    %v1147 = vunpack.c.l.b16 %v984
    %v1148 = vunpack.c.h.b16 %v984
    %v1149 = vunpack.c.l.b16 %v985
    %v1150 = vunpack.c.h.b16 %v985
    %v1151 = vunpack.c.l.b16 %v986
    %v1152 = vunpack.c.h.b16 %v986
    %v1153 = vunpack.c.l.b16 %v987
    %v1154 = vunpack.c.h.b16 %v987
    %v1155 = vunpack.c.l.b16 %v988
    %v1156 = vunpack.c.h.b16 %v988
    %v1157 = vunpack.c.l.b16 %v989
    %v1158 = vunpack.c.h.b16 %v989
    %v1159 = vunpack.c.l.b16 %v990
    %v1160 = vunpack.c.h.b16 %v990
    %v1161 = vunpack.c.l.b16 %v991
    %v1162 = vunpack.c.h.b16 %v991
    %v1163 = vunpack.c.l.b16 %v992
    %v1164 = vunpack.c.h.b16 %v992
    %v1165 = vunpack.c.l.b16 %v993
    %v1166 = vunpack.c.h.b16 %v993
    %v1167 = vunpack.c.l.b16 %v994
    %v1168 = vunpack.c.h.b16 %v994
    %v1169 = vunpack.c.l.b16 %v995
    %v1170 = vunpack.c.h.b16 %v995
    %v1171 = vunpack.c.l.b16 %v996
    %v1172 = vunpack.c.h.b16 %v996
    %v1173 = vunpack.c.l.b16 %v997
    %v1174 = vunpack.c.h.b16 %v997
    %v1175 = vunpack.c.l.b16 %v998
    %v1176 = vunpack.c.h.b16 %v998
    %v1177 = vunpack.c.l.b16 %v999
    %v1178 = vunpack.c.h.b16 %v999
    %v1179 = vunpack.c.l.b16 %v1000
    %v1180 = vunpack.c.h.b16 %v1000
    %v1181 = vunpack.c.l.b16 %v1001
    %v1182 = vunpack.c.h.b16 %v1001
    %v1183 = vunpack.c.l.b16 %v1002
    %v1184 = vunpack.c.h.b16 %v1002
    %v1185 = vunpack.c.l.b16 %v1003
    %v1186 = vunpack.c.h.b16 %v1003
    %v1187 = vunpack.c.l.b16 %v1004
    %v1188 = vunpack.c.h.b16 %v1004
    %v1189 = vunpack.c.l.b16 %v1005
    %v1190 = vunpack.c.h.b16 %v1005
    %v1191 = vunpack.c.l.b16 %v1006
    %v1192 = vunpack.c.h.b16 %v1006
    %v1193 = vunpack.c.l.b16 %v1007
    %v1194 = vunpack.c.h.b16 %v1007
    %v1195 = vunpack.c.l.b16 %v1008
    %v1196 = vunpack.c.h.b16 %v1008
    %v1197 = vunpack.c.l.b16 %v1009
    %v1198 = vunpack.c.h.b16 %v1009
    %v1199 = vunpack.c.l.b16 %v1010
    %v1200 = vunpack.c.h.b16 %v1010
    %v1201 = vunpack.c.l.b16 %v1011
    %v1202 = vunpack.c.h.b16 %v1011
    %v1203 = vunpack.c.l.b16 %v1012
    %v1204 = vunpack.c.h.b16 %v1012
    %v1205 = vunpack.c.l.b16 %v1013
    %v1206 = vunpack.c.h.b16 %v1013
    %v1207 = vunpack.c.l.b16 %v1014
    %v1208 = vunpack.c.h.b16 %v1014
    %v1209 = vunpack.c.l.b16 %v1015
    %v1210 = vunpack.c.h.b16 %v1015
    %v1211 = vunpack.c.l.b16 %v1016
    %v1212 = vunpack.c.h.b16 %v1016
    %v1213 = vunpack.c.l.b16 %v1017
    %v1214 = vunpack.c.h.b16 %v1017
    %v1215 = vunpack.c.l.b16 %v1018
    %v1216 = vunpack.c.h.b16 %v1018
    %v1217 = vunpack.c.l.b16 %v1019
    %v1218 = vunpack.c.h.b16 %v1019
    %v1219 = vunpack.c.l.b16 %v1020
    %v1220 = vunpack.c.h.b16 %v1020
    %v1221 = vunpack.c.l.b16 %v1021
    %v1222 = vunpack.c.h.b16 %v1021
    %v1223 = vunpack.c.l.b16 %v1022
    %v1224 = vunpack.c.h.b16 %v1022
    %v1225 = vunpack.c.l.b16 %v1023
    %v1226 = vunpack.c.h.b16 %v1023
    %v1227 = vunpack.c.l.b16 %v1024
    %v1228 = vunpack.c.h.b16 %v1024
    %v1229 = vpack.c.b16 %v1103, %v1101
    %v1230 = vpack.c.b16 %v1104, %v1102
    %v1231 = vpack.c.b16 %v1107, %v1105
    %v1232 = vpack.c.b16 %v1108, %v1106
    %v1233 = vpack.c.b16 %v1111, %v1109
    %v1234 = vpack.c.b16 %v1112, %v1110
    %v1235 = vpack.c.b16 %v1115, %v1113
    %v1236 = vpack.c.b16 %v1116, %v1114
    %v1237 = vpack.c.b16 %v1119, %v1117
    %v1238 = vpack.c.b16 %v1120, %v1118
    %v1239 = vpack.c.b16 %v1123, %v1121
    %v1240 = vpack.c.b16 %v1124, %v1122
    %v1241 = vpack.c.b16 %v1127, %v1125
    %v1242 = vpack.c.b16 %v1128, %v1126
    %v1243 = vpack.c.b16 %v1131, %v1129
    %v1244 = vpack.c.b16 %v1132, %v1130
    %v1245 = vpack.c.b16 %v1135, %v1133
    %v1246 = vpack.c.b16 %v1136, %v1134
    %v1247 = vpack.c.b16 %v1139, %v1137
    %v1248 = vpack.c.b16 %v1140, %v1138
    %v1249 = vpack.c.b16 %v1143, %v1141
    %v1250 = vpack.c.b16 %v1144, %v1142
    %v1251 = vpack.c.b16 %v1147, %v1145
    %v1252 = vpack.c.b16 %v1148, %v1146
    %v1253 = vpack.c.b16 %v1151, %v1149
    %v1254 = vpack.c.b16 %v1152, %v1150
    %v1255 = vpack.c.b16 %v1155, %v1153
    %v1256 = vpack.c.b16 %v1156, %v1154
    %v1257 = vpack.c.b16 %v1159, %v1157
    %v1258 = vpack.c.b16 %v1160, %v1158
    %v1259 = vpack.c.b16 %v1163, %v1161
    %v1260 = vpack.c.b16 %v1164, %v1162
    %v1261 = vpack.c.b16 %v1167, %v1165
    %v1262 = vpack.c.b16 %v1168, %v1166
    %v1263 = vpack.c.b16 %v1171, %v1169
    %v1264 = vpack.c.b16 %v1172, %v1170
    %v1265 = vpack.c.b16 %v1175, %v1173
    %v1266 = vpack.c.b16 %v1176, %v1174
    %v1267 = vpack.c.b16 %v1179, %v1177
    %v1268 = vpack.c.b16 %v1180, %v1178
    %v1269 = vpack.c.b16 %v1183, %v1181
    %v1270 = vpack.c.b16 %v1184, %v1182
    %v1271 = vpack.c.b16 %v1187, %v1185
    %v1272 = vpack.c.b16 %v1188, %v1186
    %v1273 = vpack.c.b16 %v1191, %v1189
    %v1274 = vpack.c.b16 %v1192, %v1190
    %v1275 = vpack.c.b16 %v1195, %v1193
    %v1276 = vpack.c.b16 %v1196, %v1194
    %v1277 = vpack.c.b16 %v1199, %v1197
    %v1278 = vpack.c.b16 %v1200, %v1198
    %v1279 = vpack.c.b16 %v1203, %v1201
    %v1280 = vpack.c.b16 %v1204, %v1202
    %v1281 = vpack.c.b16 %v1207, %v1205
    %v1282 = vpack.c.b16 %v1208, %v1206
    %v1283 = vpack.c.b16 %v1211, %v1209
    %v1284 = vpack.c.b16 %v1212, %v1210
    %v1285 = vpack.c.b16 %v1215, %v1213
    %v1286 = vpack.c.b16 %v1216, %v1214
    %v1287 = vpack.c.b16 %v1219, %v1217
    %v1288 = vpack.c.b16 %v1220, %v1218
    %v1289 = vpack.c.b16 %v1223, %v1221
    %v1290 = vpack.c.b16 %v1224, %v1222
    %v1291 = vpack.c.b16 %v1227, %v1225
    %v1292 = vpack.c.b16 %v1228, %v1226
    %1357 = vmatprep.subr.bf16.mxu0 %v1244
    %1358 = vmatpush1.bf16.msra.mxu0 %v1243
    %1359 = vmatprep.subr.bf16.mxu0 %v1242
    %1360 = vmatpush1.bf16.msra.mxu0 %v1241
    %1361 = vmatprep.subr.bf16.mxu0 %v1240
    %1362 = vmatpush1.bf16.msra.mxu0 %v1239
    %1363 = vmatprep.subr.bf16.mxu0 %v1238
    %1364 = vmatpush1.bf16.msra.mxu0 %v1237
    %1365 = vmatprep.subr.bf16.mxu0 %v1236
    %1366 = vmatpush1.bf16.msra.mxu0 %v1235
    %1367 = vmatprep.subr.bf16.mxu0 %v1234
    %1368 = vmatpush1.bf16.msra.mxu0 %v1233
    %1369 = vmatprep.subr.bf16.mxu0 %v1232
    %1370 = vmatpush1.bf16.msra.mxu0 %v1231
    %1371 = vmatprep.subr.bf16.mxu0 %v1230
    %1372 = vmatpush1.bf16.msra.mxu0 %v1229
    %1373 = vmatprep.subr.bf16.mxu0 %v1260
    %1374 = vmatpush2.bf16.msra.mxu0 %v1259
    %1375 = vmatprep.subr.bf16.mxu0 %v1258
    %1376 = vmatpush2.bf16.msra.mxu0 %v1257
    %1377 = vmatprep.subr.bf16.mxu0 %v1256
    %1378 = vmatpush2.bf16.msra.mxu0 %v1255
    %1379 = vmatprep.subr.bf16.mxu0 %v1254
    %1380 = vmatpush2.bf16.msra.mxu0 %v1253
    %1381 = vmatprep.subr.bf16.mxu0 %v1252
    %1382 = vmatpush2.bf16.msra.mxu0 %v1251
    %1383 = vmatprep.subr.bf16.mxu0 %v1250
    %1384 = vmatpush2.bf16.msra.mxu0 %v1249
    %1385 = vmatprep.subr.bf16.mxu0 %v1248
    %1386 = vmatpush2.bf16.msra.mxu0 %v1247
    %1387 = vmatprep.subr.bf16.mxu0 %v1246
    %1388 = vmatpush2.bf16.msra.mxu0 %v1245
    %1389 = vmatprep.mubr.bf16.mxu0 %v958
    %1390 = vmatmul.mubr.bf16.gmra.mxu0 %v957
    %v1391 = vpop.f32.mrf.mxu0
    %v1392 = vadd.f32 %v1030, %v1391
    %v1393 = vpop.f32.mrf.mxu0
    %v1394 = vadd.f32 %v1034, %v1393
    %v1395 = vpop.f32.mrf.mxu0
    %v1396 = vpop.f32.mrf.mxu0
    %1397 = vdwg.mxu0
    %1398 = vmatprep.subr.bf16.mxu0 %v1276
    %1399 = vmatpush1.bf16.msra.mxu0 %v1275
    %1400 = vmatprep.subr.bf16.mxu0 %v1274
    %1401 = vmatpush1.bf16.msra.mxu0 %v1273
    %1402 = vmatprep.subr.bf16.mxu0 %v1272
    %1403 = vmatpush1.bf16.msra.mxu0 %v1271
    %1404 = vmatprep.subr.bf16.mxu0 %v1270
    %1405 = vmatpush1.bf16.msra.mxu0 %v1269
    %1406 = vmatprep.subr.bf16.mxu0 %v1268
    %1407 = vmatpush1.bf16.msra.mxu0 %v1267
    %1408 = vmatprep.subr.bf16.mxu0 %v1266
    %1409 = vmatpush1.bf16.msra.mxu0 %v1265
    %1410 = vmatprep.subr.bf16.mxu0 %v1264
    %1411 = vmatpush1.bf16.msra.mxu0 %v1263
    %1412 = vmatprep.subr.bf16.mxu0 %v1262
    %1413 = vmatpush1.bf16.msra.mxu0 %v1261
    %1414 = vmatprep.subr.bf16.mxu0 %v1292
    %1415 = vmatpush2.bf16.msra.mxu0 %v1291
    %1416 = vmatprep.subr.bf16.mxu0 %v1290
    %1417 = vmatpush2.bf16.msra.mxu0 %v1289
    %1418 = vmatprep.subr.bf16.mxu0 %v1288
    %1419 = vmatpush2.bf16.msra.mxu0 %v1287
    %1420 = vmatprep.subr.bf16.mxu0 %v1286
    %1421 = vmatpush2.bf16.msra.mxu0 %v1285
    %1422 = vmatprep.subr.bf16.mxu0 %v1284
    %1423 = vmatpush2.bf16.msra.mxu0 %v1283
    %1424 = vmatprep.subr.bf16.mxu0 %v1282
    %1425 = vmatpush2.bf16.msra.mxu0 %v1281
    %1426 = vmatprep.subr.bf16.mxu0 %v1280
    %1427 = vmatpush2.bf16.msra.mxu0 %v1279
    %1428 = vmatprep.subr.bf16.mxu0 %v1278
    %1429 = vmatpush2.bf16.msra.mxu0 %v1277
    %1430 = vmatprep.mubr.bf16.mxu0 %v960
    %1431 = vmatmul.mubr.bf16.gmra.mxu0 %v959
    %v1432 = vpop.f32.mrf.mxu0
    %v1433 = vadd.f32 %v1392, %v1432
    %v1434 = vpop.f32.mrf.mxu0
    %v1435 = vadd.f32 %v1394, %v1434
    %v1436 = vpop.f32.mrf.mxu0
    %v1437 = vpop.f32.mrf.mxu0
    %1438 = vdwg.mxu0
    %v1439 = vmax.f32 %v1433, 0.0
    %v1440 = vmax.f32 %v1435, 0.0
    %v1441 = vpack.c.bf16 %v1439, %v1439
    %v1442 = vpack.c.bf16 %v1440, %v1440
    %v1443 = vld [vmem:[#allocation13] sm:$0xf]
    %v1444 = vld [vmem:[#allocation13 + $0x4] sm:$0xf]
    %v1445 = vld [vmem:[#allocation13 + $0x8] sm:$0xf]
    %v1446 = vld [vmem:[#allocation13 + $0xc] sm:$0xf]
    %v1447 = vld [vmem:[#allocation13 + $0x10] sm:$0xf]
    %v1448 = vld [vmem:[#allocation13 + $0x14] sm:$0xf]
    %v1449 = vld [vmem:[#allocation13 + $0x18] sm:$0xf]
    %v1450 = vld [vmem:[#allocation13 + $0x1c] sm:$0xf]
    %v1451 = vld [vmem:[#allocation13 + $0x20] sm:$0xf]
    %v1452 = vld [vmem:[#allocation13 + $0x24] sm:$0xf]
    %v1453 = vld [vmem:[#allocation13 + $0x28] sm:$0xf]
    %v1454 = vld [vmem:[#allocation13 + $0x2c] sm:$0xf]
    %v1455 = vld [vmem:[#allocation13 + $0x30] sm:$0xf]
    %v1456 = vld [vmem:[#allocation13 + $0x34] sm:$0xf]
    %v1457 = vld [vmem:[#allocation13 + $0x38] sm:$0xf]
    %v1458 = vld [vmem:[#allocation13 + $0x3c] sm:$0xf]
    %v1459 = vld [vmem:[#allocation13 + $0x40] sm:$0xf]
    %v1460 = vld [vmem:[#allocation13 + $0x44] sm:$0xf]
    %v1461 = vld [vmem:[#allocation13 + $0x48] sm:$0xf]
    %v1462 = vld [vmem:[#allocation13 + $0x4c] sm:$0xf]
    %v1463 = vld [vmem:[#allocation13 + $0x50] sm:$0xf]
    %v1464 = vld [vmem:[#allocation13 + $0x54] sm:$0xf]
    %v1465 = vld [vmem:[#allocation13 + $0x58] sm:$0xf]
    %v1466 = vld [vmem:[#allocation13 + $0x5c] sm:$0xf]
    %v1467 = vld [vmem:[#allocation13 + $0x60] sm:$0xf]
    %v1468 = vld [vmem:[#allocation13 + $0x64] sm:$0xf]
    %v1469 = vld [vmem:[#allocation13 + $0x68] sm:$0xf]
    %v1470 = vld [vmem:[#allocation13 + $0x6c] sm:$0xf]
    %v1471 = vld [vmem:[#allocation13 + $0x70] sm:$0xf]
    %v1472 = vld [vmem:[#allocation13 + $0x74] sm:$0xf]
    %v1473 = vld [vmem:[#allocation13 + $0x78] sm:$0xf]
    %v1474 = vld [vmem:[#allocation13 + $0x7c] sm:$0xf]
    %v1475 = vld [vmem:[%s12] sm:$0x1]
    %v1477 = vlaneseq
    %v1478 = vshrl.u32 %v1477, 7
    %v1479 = vsub.s32 0, %v1478
    %v1480 = vrot.slane %v1475, %v1479
    %v1514 = vunpack.c.l.b16 %v1443
    %v1515 = vunpack.c.l.b16 %v1444
    %v1516 = vunpack.c.l.b16 %v1445
    %v1517 = vunpack.c.l.b16 %v1446
    %v1518 = vunpack.c.l.b16 %v1447
    %v1519 = vunpack.c.l.b16 %v1448
    %v1520 = vunpack.c.l.b16 %v1449
    %v1521 = vunpack.c.l.b16 %v1450
    %v1522 = vunpack.c.l.b16 %v1451
    %v1523 = vunpack.c.l.b16 %v1452
    %v1524 = vunpack.c.l.b16 %v1453
    %v1525 = vunpack.c.l.b16 %v1454
    %v1526 = vunpack.c.l.b16 %v1455
    %v1527 = vunpack.c.l.b16 %v1456
    %v1528 = vunpack.c.l.b16 %v1457
    %v1529 = vunpack.c.l.b16 %v1458
    %v1530 = vunpack.c.l.b16 %v1459
    %v1531 = vunpack.c.l.b16 %v1460
    %v1532 = vunpack.c.l.b16 %v1461
    %v1533 = vunpack.c.l.b16 %v1462
    %v1534 = vunpack.c.l.b16 %v1463
    %v1535 = vunpack.c.l.b16 %v1464
    %v1536 = vunpack.c.l.b16 %v1465
    %v1537 = vunpack.c.l.b16 %v1466
    %v1538 = vunpack.c.l.b16 %v1467
    %v1539 = vunpack.c.l.b16 %v1468
    %v1540 = vunpack.c.l.b16 %v1469
    %v1541 = vunpack.c.l.b16 %v1470
    %v1542 = vunpack.c.l.b16 %v1471
    %v1543 = vunpack.c.l.b16 %v1472
    %v1544 = vunpack.c.l.b16 %v1473
    %v1545 = vunpack.c.l.b16 %v1474
    %v1546 = vpack.c.b16 %v1515, %v1514
    %v1547 = vpack.c.b16 %v1517, %v1516
    %v1548 = vpack.c.b16 %v1519, %v1518
    %v1549 = vpack.c.b16 %v1521, %v1520
    %v1550 = vpack.c.b16 %v1523, %v1522
    %v1551 = vpack.c.b16 %v1525, %v1524
    %v1552 = vpack.c.b16 %v1527, %v1526
    %v1553 = vpack.c.b16 %v1529, %v1528
    %v1554 = vpack.c.b16 %v1531, %v1530
    %v1555 = vpack.c.b16 %v1533, %v1532
    %v1556 = vpack.c.b16 %v1535, %v1534
    %v1557 = vpack.c.b16 %v1537, %v1536
    %v1558 = vpack.c.b16 %v1539, %v1538
    %v1559 = vpack.c.b16 %v1541, %v1540
    %v1560 = vpack.c.b16 %v1543, %v1542
    %v1561 = vpack.c.b16 %v1545, %v1544
    %1578 = vmatprep.subr.bf16.mxu0 0
    %1579 = vmatpush1.bf16.msra.mxu0 %v1553
    %1580 = vmatprep.subr.bf16.mxu0 0
    %1581 = vmatpush1.bf16.msra.mxu0 %v1552
    %1582 = vmatprep.subr.bf16.mxu0 0
    %1583 = vmatpush1.bf16.msra.mxu0 %v1551
    %1584 = vmatprep.subr.bf16.mxu0 0
    %1585 = vmatpush1.bf16.msra.mxu0 %v1550
    %1586 = vmatprep.subr.bf16.mxu0 0
    %1587 = vmatpush1.bf16.msra.mxu0 %v1549
    %1588 = vmatprep.subr.bf16.mxu0 0
    %1589 = vmatpush1.bf16.msra.mxu0 %v1548
    %1590 = vmatprep.subr.bf16.mxu0 0
    %1591 = vmatpush1.bf16.msra.mxu0 %v1547
    %1592 = vmatprep.subr.bf16.mxu0 0
    %1593 = vmatpush1.bf16.msra.mxu0 %v1546
    %1594 = vmatprep.subr.bf16.mxu0 0
    %1595 = vmatpush2.bf16.msra.mxu0 %v1561
    %1596 = vmatprep.subr.bf16.mxu0 0
    %1597 = vmatpush2.bf16.msra.mxu0 %v1560
    %1598 = vmatprep.subr.bf16.mxu0 0
    %1599 = vmatpush2.bf16.msra.mxu0 %v1559
    %1600 = vmatprep.subr.bf16.mxu0 0
    %1601 = vmatpush2.bf16.msra.mxu0 %v1558
    %1602 = vmatprep.subr.bf16.mxu0 0
    %1603 = vmatpush2.bf16.msra.mxu0 %v1557
    %1604 = vmatprep.subr.bf16.mxu0 0
    %1605 = vmatpush2.bf16.msra.mxu0 %v1556
    %1606 = vmatprep.subr.bf16.mxu0 0
    %1607 = vmatpush2.bf16.msra.mxu0 %v1555
    %1608 = vmatprep.subr.bf16.mxu0 0
    %1609 = vmatpush2.bf16.msra.mxu0 %v1554
    %1610 = vmatprep.mubr.bf16.mxu0 %v1442
    %1611 = vmatmul.mubr.bf16.gmra.mxu0 %v1441
    %v1612 = vpop.f32.mrf.mxu0
    %v1613 = vadd.f32 %v1480, %v1612
    %v1614 = vpop.f32.mrf.mxu0
    %v1615 = vpop.f32.mrf.mxu0
    %v1616 = vpop.f32.mrf.mxu0
    %1617 = vdwg.mxu0
    %v1618 = vlaneseq
    %v1619 = vand.u32 %v1618, 127
    %vm1620 = vcmp.lt.s32.totalorder %v1619, 8
    %v1621 = vsel %vm1620, %v1613, -1e+30
    %v1622 = vsel %vm181, %v1621, -inf
    %1623 = vmax.xlane.f32.xlu0 %v1622
    %v1624 = vpop.xlane.xlu0 %1623
    %v1625 = vsub.f32 %v1613, %v1624
    %v1626 = vmul.f32 %v1625, 1.442695
    %v1627 = vpow.pop %v1626
    %v1628 = vsel %vm1620, %v1627, 0.0
    %v1629 = vsel %vm181, %v1628, 0.0
    %1630 = vadd.xlane.f32.xlu0 %v1629
    %v1631 = vpop.xlane.xlu0 %1630
    %v1632 = vlog2.pop %v1631
    %v1633 = vmul.f32 %v1632, 0.6931472
    %v1634 = vadd.f32 %v1624, %v1633
    %v1635 = vsub.f32 %v1613, %v1634
    %v1636 = vld [vmem:[#allocation15] sm:$0xf]
    %v1637 = vld [vmem:[#allocation15 + $0x4] sm:$0xf]
    %v1638 = vld [vmem:[#allocation15 + $0x8] sm:$0xf]
    %v1639 = vld [vmem:[#allocation15 + $0xc] sm:$0xf]
    %v1640 = vld [vmem:[#allocation15 + $0x10] sm:$0xf]
    %v1641 = vld [vmem:[#allocation15 + $0x14] sm:$0xf]
    %v1642 = vld [vmem:[#allocation15 + $0x18] sm:$0xf]
    %v1643 = vld [vmem:[#allocation15 + $0x1c] sm:$0xf]
    %v1644 = vld [vmem:[#allocation15 + $0x20] sm:$0xf]
    %v1645 = vld [vmem:[#allocation15 + $0x24] sm:$0xf]
    %v1646 = vld [vmem:[#allocation15 + $0x28] sm:$0xf]
    %v1647 = vld [vmem:[#allocation15 + $0x2c] sm:$0xf]
    %v1648 = vld [vmem:[#allocation15 + $0x30] sm:$0xf]
    %v1649 = vld [vmem:[#allocation15 + $0x34] sm:$0xf]
    %v1650 = vld [vmem:[#allocation15 + $0x38] sm:$0xf]
    %v1651 = vld [vmem:[#allocation15 + $0x3c] sm:$0xf]
    %v1652 = vld [vmem:[#allocation15 + $0x40] sm:$0xf]
    %v1653 = vld [vmem:[#allocation15 + $0x44] sm:$0xf]
    %v1654 = vld [vmem:[#allocation15 + $0x48] sm:$0xf]
    %v1655 = vld [vmem:[#allocation15 + $0x4c] sm:$0xf]
    %v1656 = vld [vmem:[#allocation15 + $0x50] sm:$0xf]
    %v1657 = vld [vmem:[#allocation15 + $0x54] sm:$0xf]
    %v1658 = vld [vmem:[#allocation15 + $0x58] sm:$0xf]
    %v1659 = vld [vmem:[#allocation15 + $0x5c] sm:$0xf]
    %v1660 = vld [vmem:[#allocation15 + $0x60] sm:$0xf]
    %v1661 = vld [vmem:[#allocation15 + $0x64] sm:$0xf]
    %v1662 = vld [vmem:[#allocation15 + $0x68] sm:$0xf]
    %v1663 = vld [vmem:[#allocation15 + $0x6c] sm:$0xf]
    %v1664 = vld [vmem:[#allocation15 + $0x70] sm:$0xf]
    %v1665 = vld [vmem:[#allocation15 + $0x74] sm:$0xf]
    %v1666 = vld [vmem:[#allocation15 + $0x78] sm:$0xf]
    %v1667 = vld [vmem:[#allocation15 + $0x7c] sm:$0xf]
    %v1668 = vld [vmem:[#allocation15 + $0x80] sm:$0xf]
    %v1669 = vld [vmem:[#allocation15 + $0x84] sm:$0xf]
    %v1670 = vld [vmem:[#allocation15 + $0x88] sm:$0xf]
    %v1671 = vld [vmem:[#allocation15 + $0x8c] sm:$0xf]
    %v1672 = vld [vmem:[#allocation15 + $0x90] sm:$0xf]
    %v1673 = vld [vmem:[#allocation15 + $0x94] sm:$0xf]
    %v1674 = vld [vmem:[#allocation15 + $0x98] sm:$0xf]
    %v1675 = vld [vmem:[#allocation15 + $0x9c] sm:$0xf]
    %v1676 = vld [vmem:[#allocation15 + $0xa0] sm:$0xf]
    %v1677 = vld [vmem:[#allocation15 + $0xa4] sm:$0xf]
    %v1678 = vld [vmem:[#allocation15 + $0xa8] sm:$0xf]
    %v1679 = vld [vmem:[#allocation15 + $0xac] sm:$0xf]
    %v1680 = vld [vmem:[#allocation15 + $0xb0] sm:$0xf]
    %v1681 = vld [vmem:[#allocation15 + $0xb4] sm:$0xf]
    %v1682 = vld [vmem:[#allocation15 + $0xb8] sm:$0xf]
    %v1683 = vld [vmem:[#allocation15 + $0xbc] sm:$0xf]
    %v1684 = vld [vmem:[#allocation15 + $0xc0] sm:$0xf]
    %v1685 = vld [vmem:[#allocation15 + $0xc4] sm:$0xf]
    %v1686 = vld [vmem:[#allocation15 + $0xc8] sm:$0xf]
    %v1687 = vld [vmem:[#allocation15 + $0xcc] sm:$0xf]
    %v1688 = vld [vmem:[#allocation15 + $0xd0] sm:$0xf]
    %v1689 = vld [vmem:[#allocation15 + $0xd4] sm:$0xf]
    %v1690 = vld [vmem:[#allocation15 + $0xd8] sm:$0xf]
    %v1691 = vld [vmem:[#allocation15 + $0xdc] sm:$0xf]
    %v1692 = vld [vmem:[#allocation15 + $0xe0] sm:$0xf]
    %v1693 = vld [vmem:[#allocation15 + $0xe4] sm:$0xf]
    %v1694 = vld [vmem:[#allocation15 + $0xe8] sm:$0xf]
    %v1695 = vld [vmem:[#allocation15 + $0xec] sm:$0xf]
    %v1696 = vld [vmem:[#allocation15 + $0xf0] sm:$0xf]
    %v1697 = vld [vmem:[#allocation15 + $0xf4] sm:$0xf]
    %v1698 = vld [vmem:[#allocation15 + $0xf8] sm:$0xf]
    %v1699 = vld [vmem:[#allocation15 + $0xfc] sm:$0xf]
    %v1700 = vld [vmem:[%s14] sm:$0x1]
    %v1702 = vlaneseq
    %v1703 = vshrl.u32 %v1702, 7
    %v1704 = vsub.s32 0, %v1703
    %v1705 = vrot.slane %v1700, %v1704
    %v1771 = vunpack.c.l.b16 %v1636
    %v1772 = vunpack.c.l.b16 %v1637
    %v1773 = vunpack.c.l.b16 %v1638
    %v1774 = vunpack.c.l.b16 %v1639
    %v1775 = vunpack.c.l.b16 %v1640
    %v1776 = vunpack.c.l.b16 %v1641
    %v1777 = vunpack.c.l.b16 %v1642
    %v1778 = vunpack.c.l.b16 %v1643
    %v1779 = vunpack.c.l.b16 %v1644
    %v1780 = vunpack.c.l.b16 %v1645
    %v1781 = vunpack.c.l.b16 %v1646
    %v1782 = vunpack.c.l.b16 %v1647
    %v1783 = vunpack.c.l.b16 %v1648
    %v1784 = vunpack.c.l.b16 %v1649
    %v1785 = vunpack.c.l.b16 %v1650
    %v1786 = vunpack.c.l.b16 %v1651
    %v1787 = vunpack.c.l.b16 %v1652
    %v1788 = vunpack.c.l.b16 %v1653
    %v1789 = vunpack.c.l.b16 %v1654
    %v1790 = vunpack.c.l.b16 %v1655
    %v1791 = vunpack.c.l.b16 %v1656
    %v1792 = vunpack.c.l.b16 %v1657
    %v1793 = vunpack.c.l.b16 %v1658
    %v1794 = vunpack.c.l.b16 %v1659
    %v1795 = vunpack.c.l.b16 %v1660
    %v1796 = vunpack.c.l.b16 %v1661
    %v1797 = vunpack.c.l.b16 %v1662
    %v1798 = vunpack.c.l.b16 %v1663
    %v1799 = vunpack.c.l.b16 %v1664
    %v1800 = vunpack.c.l.b16 %v1665
    %v1801 = vunpack.c.l.b16 %v1666
    %v1802 = vunpack.c.l.b16 %v1667
    %v1803 = vunpack.c.l.b16 %v1668
    %v1804 = vunpack.c.l.b16 %v1669
    %v1805 = vunpack.c.l.b16 %v1670
    %v1806 = vunpack.c.l.b16 %v1671
    %v1807 = vunpack.c.l.b16 %v1672
    %v1808 = vunpack.c.l.b16 %v1673
    %v1809 = vunpack.c.l.b16 %v1674
    %v1810 = vunpack.c.l.b16 %v1675
    %v1811 = vunpack.c.l.b16 %v1676
    %v1812 = vunpack.c.l.b16 %v1677
    %v1813 = vunpack.c.l.b16 %v1678
    %v1814 = vunpack.c.l.b16 %v1679
    %v1815 = vunpack.c.l.b16 %v1680
    %v1816 = vunpack.c.l.b16 %v1681
    %v1817 = vunpack.c.l.b16 %v1682
    %v1818 = vunpack.c.l.b16 %v1683
    %v1819 = vunpack.c.l.b16 %v1684
    %v1820 = vunpack.c.l.b16 %v1685
    %v1821 = vunpack.c.l.b16 %v1686
    %v1822 = vunpack.c.l.b16 %v1687
    %v1823 = vunpack.c.l.b16 %v1688
    %v1824 = vunpack.c.l.b16 %v1689
    %v1825 = vunpack.c.l.b16 %v1690
    %v1826 = vunpack.c.l.b16 %v1691
    %v1827 = vunpack.c.l.b16 %v1692
    %v1828 = vunpack.c.l.b16 %v1693
    %v1829 = vunpack.c.l.b16 %v1694
    %v1830 = vunpack.c.l.b16 %v1695
    %v1831 = vunpack.c.l.b16 %v1696
    %v1832 = vunpack.c.l.b16 %v1697
    %v1833 = vunpack.c.l.b16 %v1698
    %v1834 = vunpack.c.l.b16 %v1699
    %v1835 = vpack.c.b16 %v1772, %v1771
    %v1836 = vpack.c.b16 %v1774, %v1773
    %v1837 = vpack.c.b16 %v1776, %v1775
    %v1838 = vpack.c.b16 %v1778, %v1777
    %v1839 = vpack.c.b16 %v1780, %v1779
    %v1840 = vpack.c.b16 %v1782, %v1781
    %v1841 = vpack.c.b16 %v1784, %v1783
    %v1842 = vpack.c.b16 %v1786, %v1785
    %v1843 = vpack.c.b16 %v1788, %v1787
    %v1844 = vpack.c.b16 %v1790, %v1789
    %v1845 = vpack.c.b16 %v1792, %v1791
    %v1846 = vpack.c.b16 %v1794, %v1793
    %v1847 = vpack.c.b16 %v1796, %v1795
    %v1848 = vpack.c.b16 %v1798, %v1797
    %v1849 = vpack.c.b16 %v1800, %v1799
    %v1850 = vpack.c.b16 %v1802, %v1801
    %v1851 = vpack.c.b16 %v1804, %v1803
    %v1852 = vpack.c.b16 %v1806, %v1805
    %v1853 = vpack.c.b16 %v1808, %v1807
    %v1854 = vpack.c.b16 %v1810, %v1809
    %v1855 = vpack.c.b16 %v1812, %v1811
    %v1856 = vpack.c.b16 %v1814, %v1813
    %v1857 = vpack.c.b16 %v1816, %v1815
    %v1858 = vpack.c.b16 %v1818, %v1817
    %v1859 = vpack.c.b16 %v1820, %v1819
    %v1860 = vpack.c.b16 %v1822, %v1821
    %v1861 = vpack.c.b16 %v1824, %v1823
    %v1862 = vpack.c.b16 %v1826, %v1825
    %v1863 = vpack.c.b16 %v1828, %v1827
    %v1864 = vpack.c.b16 %v1830, %v1829
    %v1865 = vpack.c.b16 %v1832, %v1831
    %v1866 = vpack.c.b16 %v1834, %v1833
    %1899 = vmatprep.subr.bf16.mxu0 0
    %1900 = vmatpush1.bf16.msra.mxu0 %v1842
    %1901 = vmatprep.subr.bf16.mxu0 0
    %1902 = vmatpush1.bf16.msra.mxu0 %v1841
    %1903 = vmatprep.subr.bf16.mxu0 0
    %1904 = vmatpush1.bf16.msra.mxu0 %v1840
    %1905 = vmatprep.subr.bf16.mxu0 0
    %1906 = vmatpush1.bf16.msra.mxu0 %v1839
    %1907 = vmatprep.subr.bf16.mxu0 0
    %1908 = vmatpush1.bf16.msra.mxu0 %v1838
    %1909 = vmatprep.subr.bf16.mxu0 0
    %1910 = vmatpush1.bf16.msra.mxu0 %v1837
    %1911 = vmatprep.subr.bf16.mxu0 0
    %1912 = vmatpush1.bf16.msra.mxu0 %v1836
    %1913 = vmatprep.subr.bf16.mxu0 0
    %1914 = vmatpush1.bf16.msra.mxu0 %v1835
    %1915 = vmatprep.subr.bf16.mxu0 0
    %1916 = vmatpush2.bf16.msra.mxu0 %v1850
    %1917 = vmatprep.subr.bf16.mxu0 0
    %1918 = vmatpush2.bf16.msra.mxu0 %v1849
    %1919 = vmatprep.subr.bf16.mxu0 0
    %1920 = vmatpush2.bf16.msra.mxu0 %v1848
    %1921 = vmatprep.subr.bf16.mxu0 0
    %1922 = vmatpush2.bf16.msra.mxu0 %v1847
    %1923 = vmatprep.subr.bf16.mxu0 0
    %1924 = vmatpush2.bf16.msra.mxu0 %v1846
    %1925 = vmatprep.subr.bf16.mxu0 0
    %1926 = vmatpush2.bf16.msra.mxu0 %v1845
    %1927 = vmatprep.subr.bf16.mxu0 0
    %1928 = vmatpush2.bf16.msra.mxu0 %v1844
    %1929 = vmatprep.subr.bf16.mxu0 0
    %1930 = vmatpush2.bf16.msra.mxu0 %v1843
    %1931 = vmatprep.mubr.bf16.mxu0 %v958
    %1932 = vmatmul.mubr.bf16.gmra.mxu0 %v957
    %v1933 = vpop.f32.mrf.mxu0
    %v1934 = vadd.f32 %v1705, %v1933
    %v1935 = vpop.f32.mrf.mxu0
    %v1936 = vpop.f32.mrf.mxu0
    %v1937 = vpop.f32.mrf.mxu0
    %1938 = vdwg.mxu0
    %1939 = vmatprep.subr.bf16.mxu0 0
    %1940 = vmatpush1.bf16.msra.mxu0 %v1858
    %1941 = vmatprep.subr.bf16.mxu0 0
    %1942 = vmatpush1.bf16.msra.mxu0 %v1857
    %1943 = vmatprep.subr.bf16.mxu0 0
    %1944 = vmatpush1.bf16.msra.mxu0 %v1856
    %1945 = vmatprep.subr.bf16.mxu0 0
    %1946 = vmatpush1.bf16.msra.mxu0 %v1855
    %1947 = vmatprep.subr.bf16.mxu0 0
    %1948 = vmatpush1.bf16.msra.mxu0 %v1854
    %1949 = vmatprep.subr.bf16.mxu0 0
    %1950 = vmatpush1.bf16.msra.mxu0 %v1853
    %1951 = vmatprep.subr.bf16.mxu0 0
    %1952 = vmatpush1.bf16.msra.mxu0 %v1852
    %1953 = vmatprep.subr.bf16.mxu0 0
    %1954 = vmatpush1.bf16.msra.mxu0 %v1851
    %1955 = vmatprep.subr.bf16.mxu0 0
    %1956 = vmatpush2.bf16.msra.mxu0 %v1866
    %1957 = vmatprep.subr.bf16.mxu0 0
    %1958 = vmatpush2.bf16.msra.mxu0 %v1865
    %1959 = vmatprep.subr.bf16.mxu0 0
    %1960 = vmatpush2.bf16.msra.mxu0 %v1864
    %1961 = vmatprep.subr.bf16.mxu0 0
    %1962 = vmatpush2.bf16.msra.mxu0 %v1863
    %1963 = vmatprep.subr.bf16.mxu0 0
    %1964 = vmatpush2.bf16.msra.mxu0 %v1862
    %1965 = vmatprep.subr.bf16.mxu0 0
    %1966 = vmatpush2.bf16.msra.mxu0 %v1861
    %1967 = vmatprep.subr.bf16.mxu0 0
    %1968 = vmatpush2.bf16.msra.mxu0 %v1860
    %1969 = vmatprep.subr.bf16.mxu0 0
    %1970 = vmatpush2.bf16.msra.mxu0 %v1859
    %1971 = vmatprep.mubr.bf16.mxu0 %v960
    %1972 = vmatmul.mubr.bf16.gmra.mxu0 %v959
    %v1973 = vpop.f32.mrf.mxu0
    %v1974 = vadd.f32 %v1934, %v1973
    %v1975 = vpop.f32.mrf.mxu0
    %v1976 = vpop.f32.mrf.mxu0
    %v1977 = vpop.f32.mrf.mxu0
    %1978 = vdwg.mxu0
    %v1979 = vtanh.pop %v1974
    %v1980 = vsel %vm1620, %v1635, %v1979
    %1981 = vst [vmem:[%s15] sm:$0x3] %v1980
    // Predicated region
    $region98: #{model_forward.1} parent=1 // pred_check
      _
    $region99: #{model_forward.1} parent=1 // pred_check_branch
      %1983 = sbr.rel (0) target = $region101
    $region100: #{model_forward.1} parent=1 // pred_region
      _
    $region101: #{model_forward.1} parent=1 // pred_fallthru
      _
    // Predicated region
    $region102: #{model_forward.1} parent=1 // pred_check
      _
    $region103: #{model_forward.1} parent=1 // pred_check_branch
      %1985 = sbr.rel (0) target = $region105
    $region104: #{model_forward.1} parent=1 // pred_region
      _
    $region105: #{model_forward.1} parent=1 // pred_fallthru
      _
    %1986 = vsyncpa [#allocation3], 1
    %1987 = vsyncpa [#allocation5], 1
    %1988 = vsyncpa [#allocation8], 1
    %1989 = vsyncpa [#allocation11], 1
    %1990 = vsyncpa [#allocation14], 1

</llo_original>
